<compile_context>
chip_gen: v7x
topology: tpu7x:2x2x1
jax: 0.10.0
libtpu: 0.0.40
codegen_flags: <defaults>
</compile_context>

<pallas_src>
import functools

import jax
import jax.numpy as jnp
from jax.experimental import pallas as pl
from jax.experimental.pallas import tpu as pltpu

VMEM_SPEC = pl.BlockSpec(memory_space=pltpu.MemorySpace.VMEM)
NEG = -1e30


# ------------------------------ fused kernel --------------------------------

def _net_kernel(emb_ref, ids_ref, adj_ref, bcol_ref, brow_ref,
                w1_ref, b1_ref, p1_ref,
                w2_ref, b2_ref, p2_ref,
                w3_ref, b3_ref, p3_ref,
                l1w_ref, l1b_ref, l2w_ref, l2b_ref, l3w_ref, l3b_ref,
                o_ref, *, num_graphs, ratio):
    f32 = jnp.float32
    bf16 = jnp.bfloat16
    n = ids_ref.shape[0]
    n_emb = emb_ref.shape[0]

    def b2f(b):                      # bool -> {0., 1.} float32
        return jnp.where(b, 1.0, 0.0).astype(f32)

    # ---- embedding lookup as one-hot @ table (table lives in VMEM) ----------
    lane_ids = jax.lax.broadcasted_iota(jnp.int32, (n, n_emb), 1)
    onehot = b2f(ids_ref[...] == lane_ids).astype(bf16)              # [N, E]
    x = jnp.dot(onehot, emb_ref[...], preferred_element_type=f32)    # [N, 128]

    # ---- constants reused by all three layers (hoisted broadcasts) ----------
    adj = adj_ref[...]                                               # [N, N]
    row_idx = jax.lax.broadcasted_iota(jnp.int32, (n, n), 0)         # i
    col_idx = jax.lax.broadcasted_iota(jnp.int32, (n, n), 1)         # j
    eye = b2f(row_idx == col_idx)                                    # [N, N]
    same = b2f(bcol_ref[...] == brow_ref[...])                       # [N, N]
    graph_iota = jax.lax.broadcasted_iota(jnp.int32, (num_graphs, n), 0)
    member0 = b2f(brow_ref[...] == graph_iota)                       # [B, N]

    def col_to_row(col):             # [N,1] -> [1,N] without a transpose op
        return jnp.sum(col * eye, axis=0, keepdims=True)

    mask_col = jnp.ones((n, 1), f32)
    mask_row = jnp.ones((1, n), f32)
    xsum = jnp.zeros((num_graphs, 256), f32)

    layers = ((w1_ref, b1_ref, p1_ref),
              (w2_ref, b2_ref, p2_ref),
              (w3_ref, b3_ref, p3_ref))

    for w_ref, bias_ref, p_ref in layers:
        # --- SAGEConv (mean aggr) + ReLU, single stacked MXU matmul ----------
        a = adj * mask_col * mask_row                                # edge filter
        deg = jnp.sum(a, axis=1, keepdims=True)
        a_norm = (a / jnp.maximum(deg, 1.0)).astype(bf16)
        agg = jnp.dot(a_norm, x.astype(bf16), preferred_element_type=f32)
        cat = jnp.concatenate([agg.astype(bf16), x.astype(bf16)], axis=1)
        x = jnp.maximum(
            jnp.dot(cat, w_ref[...], preferred_element_type=f32) + bias_ref[...],
            0.0)                                                     # [N, 128]

        # --- TopKPooling score: tanh(x . p_hat), p_hat pre-normalized --------
        s_col = jnp.tanh(jnp.sum(x * p_ref[...], axis=1, keepdims=True))  # [N,1]
        s_row = col_to_row(s_col)                                         # [1,N]

        # --- per-graph top-k as a static keep mask (ties -> lower index) -----
        sm_col = jnp.where(mask_col > 0.0, s_col, NEG)
        sm_row = jnp.where(mask_row > 0.0, s_row, NEG)
        both = same * mask_col * mask_row
        higher = b2f((sm_row > sm_col) |
                     ((sm_row == sm_col) & (col_idx < row_idx)))
        rank = jnp.sum(both * higher, axis=1, keepdims=True)         # [N,1]
        count = jnp.sum(both, axis=1, keepdims=True)
        k = jnp.ceil(ratio * count)
        keep_col = jnp.where((mask_col > 0.0) & (rank < k), 1.0, 0.0)
        keep_row = col_to_row(keep_col)

        # --- gate kept nodes by tanh(score), drop the rest --------------------
        x = x * s_col * keep_col

        # --- readout: [global_max | global_mean] per graph --------------------
        member = member0 * keep_row                                  # [B, N]
        counts = jnp.sum(member, axis=1, keepdims=True)              # [B, 1]
        gap = jnp.dot(member, x, preferred_element_type=f32) / jnp.maximum(
            counts, 1.0)                                             # [B, F]
        gmp = jnp.max(jnp.where(member[:, :, None] > 0.0, x[None, :, :], NEG),
                      axis=1)                                        # [B, F]
        gmp = jnp.where(counts > 0.0, gmp, 0.0)                      # empty guard
        xsum = xsum + jnp.concatenate([gmp, gap], axis=1)            # [B, 256]

        mask_col, mask_row = keep_col, keep_row

    # ---- MLP head ------------------------------------------------------------
    h = jnp.maximum(
        jnp.dot(xsum, l1w_ref[...], preferred_element_type=f32) + l1b_ref[...],
        0.0)
    h = jnp.maximum(
        jnp.dot(h, l2w_ref[...], preferred_element_type=f32) + l2b_ref[...],
        0.0)
    # TODO(synk): F.dropout(p=0.5) skipped (inference semantics, identity).
    z = jnp.dot(h, l3w_ref[...], preferred_element_type=f32) + l3b_ref[...]
    o_ref[...] = jax.nn.sigmoid(z)          # [B, 128], all lanes identical


# ------------------------------ wrapper --------------------------------------

@functools.partial(jax.jit, static_argnums=(4,))
def net_forward(params, x_ids, edge_index, batch, num_graphs, ratio=0.8):
    n = x_ids.shape[0]
    f = params["embedding"].shape[1]

    # Dense UN-normalized adjacency (edge counts, dst <- src) built once;
    # per-layer masking + row normalization happen inside the kernel.
    src, dst = edge_index[0], edge_index[1]
    adj = jnp.zeros((n, n), jnp.float32).at[dst, src].add(1.0)

    ids_col = x_ids[:, :1].astype(jnp.int32)                 # [N, 1]
    batch_col = batch.astype(jnp.int32)[:, None]             # [N, 1]
    batch_row = batch.astype(jnp.int32)[None, :]             # [1, N]

    emb = params["embedding"].astype(jnp.bfloat16)           # [E, 128]

    def stacked_w(layer):            # [Wl; Wr] so [agg | x] @ W == agg@Wl + x@Wr
        return jnp.concatenate(
            [params[f"conv{layer}_wl"], params[f"conv{layer}_wr"]],
            axis=0).astype(jnp.bfloat16)                     # [256, 128]

    def p_hat(layer):                # pre-normalized projection, row layout
        p = params[f"pool{layer}_p"]                         # [128, 1]
        return (p / jnp.linalg.norm(p)).reshape(1, f)        # [1, 128]

    # lane-broadcast lin3 so the kernel output is lane-dense [B, 128]
    l3w_wide = jnp.tile(params["lin3_w"], (1, 128))          # [64, 128]
    l3b_wide = jnp.tile(params["lin3_b"], (1, 128))          # [1, 128]

    args = (emb, ids_col, adj, batch_col, batch_row,
            stacked_w(1), params["conv1_b"], p_hat(1),
            stacked_w(2), params["conv2_b"], p_hat(2),
            stacked_w(3), params["conv3_b"], p_hat(3),
            params["lin1_w"], params["lin1_b"],
            params["lin2_w"], params["lin2_b"],
            l3w_wide, l3b_wide)

    out = pl.pallas_call(
        functools.partial(_net_kernel, num_graphs=num_graphs, ratio=ratio),
        out_shape=jax.ShapeDtypeStruct((num_graphs, 128), jnp.float32),
        in_specs=[VMEM_SPEC] * len(args),
        out_specs=VMEM_SPEC,
        compiler_params=pltpu.CompilerParams(
            vmem_limit_bytes=32 * 1024 * 1024),
    )(*args)
    return out[:, 0]                                         # squeeze(1)


# ------------------------------ parameters ----------------------------------

def init_params(key, embed_dim=128, different_ids=200):
    keys = jax.random.split(key, 16)

    def dense(k, shape, scale=0.05):
        return scale * jax.random.normal(k, shape, jnp.float32)

    p = {}
    p["embedding"] = dense(keys[0], (different_ids, embed_dim), 0.1)
    ki = 1
    for layer in (1, 2, 3):
        in_dim = embed_dim if layer == 1 else 128
        p[f"conv{layer}_wl"] = dense(keys[ki], (in_dim, 128)); ki += 1  # lin_l
        p[f"conv{layer}_wr"] = dense(keys[ki], (in_dim, 128)); ki += 1  # lin_r
        p[f"conv{layer}_b"] = jnp.zeros((1, 128), jnp.float32)
        p[f"pool{layer}_p"] = dense(keys[ki], (128, 1)); ki += 1        # TopK proj
    p["lin1_w"] = dense(keys[ki], (256, 128)); ki += 1
    p["lin1_b"] = jnp.zeros((1, 128), jnp.float32)
    p["lin2_w"] = dense(keys[ki], (128, 64)); ki += 1
    p["lin2_b"] = jnp.zeros((1, 64), jnp.float32)
    p["lin3_w"] = dense(keys[ki], (64, 1)); ki += 1
    p["lin3_b"] = jnp.zeros((1, 1), jnp.float32)
    return p


# --------------------------------- main --------------------------------------

if __name__ == "__main__":
    key = jax.random.PRNGKey(0)
    k_param, k_ids, k_src, k_dst = jax.random.split(key, 4)

    embed_dim = 128          # fixed by the module (lin1 expects 2*128 = 256)
    different_ids = 200
    num_graphs = 2
    nodes_per_graph = 8
    num_nodes = num_graphs * nodes_per_graph
    edges_per_graph = 24

    params = init_params(k_param, embed_dim, different_ids)

    # data.x : [N, 1] int ids;  data.batch : [N];  data.edge_index : [2, E]
    x_ids = jax.random.randint(k_ids, (num_nodes, 1), 0, different_ids,
                               dtype=jnp.int32)
    batch = jnp.repeat(jnp.arange(num_graphs, dtype=jnp.int32), nodes_per_graph)

    srcs, dsts = [], []
    for g in range(num_graphs):
        ks = jax.random.fold_in(k_src, g)
        kd = jax.random.fold_in(k_dst, g)
        s = jax.random.randint(ks, (edges_per_graph,), 0, nodes_per_graph,
                               dtype=jnp.int32) + g * nodes_per_graph
        d = jax.random.randint(kd, (edges_per_graph,), 0, nodes_per_graph,
                               dtype=jnp.int32) + g * nodes_per_graph
        srcs.append(s)
        dsts.append(d)
    edge_index = jnp.stack([jnp.concatenate(srcs), jnp.concatenate(dsts)])

    out = net_forward(params, x_ids, edge_index, batch, num_graphs)
    out = jax.block_until_ready(out)
    assert out.shape == (num_graphs,)
    assert bool(jnp.all(jnp.isfinite(out)))
    assert bool(jnp.all((out >= 0.0) & (out <= 1.0)))
    print("KERNEL_OK")
</pallas_src>

<mosaic_0001>
module attributes {stable_mosaic.version = 11 : i64} {
  func.func private @main(%arg0: i32) attributes {dimension_semantics = [#tpu.dimension_semantics<core_parallel>], iteration_bounds = array<i64: 2>, tpu.core_type = #tpu.core_type<sc_scalar_subcore>, window_params = []} {
    return
  }
}

module attributes {stable_mosaic.version = 11 : i64} {
  func.func private @main(%arg0: i32) attributes {dimension_semantics = [#tpu.dimension_semantics<core_parallel>], iteration_bounds = array<i64: 2>, tpu.core_type = #tpu.core_type<sc_scalar_subcore>, window_params = []} {
    return
  }
}

module attributes {stable_mosaic.version = 11 : i64} {
  func.func @_net_kernel(%arg0: memref<200x128xbf16, #tpu.memory_space<vmem>>, %arg1: memref<16x1xi32, #tpu.memory_space<vmem>>, %arg2: memref<16x16xf32, #tpu.memory_space<vmem>>, %arg3: memref<16x1xi32, #tpu.memory_space<vmem>>, %arg4: memref<1x16xi32, #tpu.memory_space<vmem>>, %arg5: memref<256x128xbf16, #tpu.memory_space<vmem>>, %arg6: memref<1x128xf32, #tpu.memory_space<vmem>>, %arg7: memref<1x128xf32, #tpu.memory_space<vmem>>, %arg8: memref<256x128xbf16, #tpu.memory_space<vmem>>, %arg9: memref<1x128xf32, #tpu.memory_space<vmem>>, %arg10: memref<1x128xf32, #tpu.memory_space<vmem>>, %arg11: memref<256x128xbf16, #tpu.memory_space<vmem>>, %arg12: memref<1x128xf32, #tpu.memory_space<vmem>>, %arg13: memref<1x128xf32, #tpu.memory_space<vmem>>, %arg14: memref<256x128xf32, #tpu.memory_space<vmem>>, %arg15: memref<1x128xf32, #tpu.memory_space<vmem>>, %arg16: memref<128x64xf32, #tpu.memory_space<vmem>>, %arg17: memref<1x64xf32, #tpu.memory_space<vmem>>, %arg18: memref<64x128xf32, #tpu.memory_space<vmem>>, %arg19: memref<1x128xf32, #tpu.memory_space<vmem>>, %arg20: memref<2x128xf32, #tpu.memory_space<vmem>>) attributes {dimension_semantics = [], scalar_prefetch = 0 : i64, scratch_operands = 0 : i64, tpu.core_type = #tpu.core_type<tc>} {
    %0 = tpu.iota {dimensions = array<i32: 1>} : vector<16x200xi32>
    %c0 = arith.constant 0 : index
    %c0_0 = arith.constant 0 : index
    %1 = vector.load %arg1[%c0, %c0_0] : memref<16x1xi32, #tpu.memory_space<vmem>>, vector<16x1xi32>
    %2 = vector.broadcast %1 : vector<16x1xi32> to vector<16x200xi32>
    %3 = arith.cmpi eq, %2, %0 : vector<16x200xi32>
    %cst = arith.constant 1.000000e+00 : f32
    %cst_1 = arith.constant 0.000000e+00 : f32
    %4 = vector.broadcast %cst : f32 to vector<16x200xf32>
    %5 = vector.broadcast %cst_1 : f32 to vector<16x200xf32>
    %6 = arith.select %3, %4, %5 : vector<16x200xi1>, vector<16x200xf32>
    %7 = arith.truncf %6 : vector<16x200xf32> to vector<16x200xbf16>
    %c0_2 = arith.constant 0 : index
    %c0_3 = arith.constant 0 : index
    %8 = vector.load %arg0[%c0_2, %c0_3] : memref<200x128xbf16, #tpu.memory_space<vmem>>, vector<200x128xbf16>
    %cst_4 = arith.constant dense<0.000000e+00> : vector<16x128xf32>
    %9 = tpu.matmul %7, %8, %cst_4 {dimension_numbers = #tpu.dot_dimension_numbers<[1], [0], [0], [1], [0, 0, 1, 1], [], []>} : vector<16x200xbf16>, vector<200x128xbf16>, vector<16x128xf32> -> vector<16x128xf32>
    %c0_5 = arith.constant 0 : index
    %c0_6 = arith.constant 0 : index
    %10 = vector.load %arg2[%c0_5, %c0_6] : memref<16x16xf32, #tpu.memory_space<vmem>>, vector<16x16xf32>
    %11 = tpu.iota {dimensions = array<i32: 0>} : vector<16x16xi32>
    %12 = tpu.iota {dimensions = array<i32: 1>} : vector<16x16xi32>
    %13 = arith.cmpi eq, %11, %12 : vector<16x16xi32>
    %cst_7 = arith.constant 1.000000e+00 : f32
    %cst_8 = arith.constant 0.000000e+00 : f32
    %14 = vector.broadcast %cst_7 : f32 to vector<16x16xf32>
    %15 = vector.broadcast %cst_8 : f32 to vector<16x16xf32>
    %16 = arith.select %13, %14, %15 : vector<16x16xi1>, vector<16x16xf32>
    %c0_9 = arith.constant 0 : index
    %c0_10 = arith.constant 0 : index
    %17 = vector.load %arg3[%c0_9, %c0_10] : memref<16x1xi32, #tpu.memory_space<vmem>>, vector<16x1xi32>
    %c0_11 = arith.constant 0 : index
    %c0_12 = arith.constant 0 : index
    %18 = vector.load %arg4[%c0_11, %c0_12] : memref<1x16xi32, #tpu.memory_space<vmem>>, vector<1x16xi32>
    %19 = vector.broadcast %17 : vector<16x1xi32> to vector<16x16xi32>
    %20 = vector.broadcast %18 : vector<1x16xi32> to vector<16x16xi32>
    %21 = arith.cmpi eq, %19, %20 : vector<16x16xi32>
    %cst_13 = arith.constant 1.000000e+00 : f32
    %cst_14 = arith.constant 0.000000e+00 : f32
    %22 = vector.broadcast %cst_13 : f32 to vector<16x16xf32>
    %23 = vector.broadcast %cst_14 : f32 to vector<16x16xf32>
    %24 = arith.select %21, %22, %23 : vector<16x16xi1>, vector<16x16xf32>
    %25 = tpu.iota {dimensions = array<i32: 0>} : vector<2x16xi32>
    %c0_15 = arith.constant 0 : index
    %c0_16 = arith.constant 0 : index
    %26 = vector.load %arg4[%c0_15, %c0_16] : memref<1x16xi32, #tpu.memory_space<vmem>>, vector<1x16xi32>
    %27 = vector.broadcast %26 : vector<1x16xi32> to vector<2x16xi32>
    %28 = arith.cmpi eq, %27, %25 : vector<2x16xi32>
    %cst_17 = arith.constant 1.000000e+00 : f32
    %cst_18 = arith.constant 0.000000e+00 : f32
    %29 = vector.broadcast %cst_17 : f32 to vector<2x16xf32>
    %30 = vector.broadcast %cst_18 : f32 to vector<2x16xf32>
    %31 = arith.select %28, %29, %30 : vector<2x16xi1>, vector<2x16xf32>
    %cst_19 = arith.constant 1.000000e+00 : f32
    %32 = vector.broadcast %cst_19 : f32 to vector<16x1xf32>
    %cst_20 = arith.constant 1.000000e+00 : f32
    %33 = vector.broadcast %cst_20 : f32 to vector<1x16xf32>
    %cst_21 = arith.constant 0.000000e+00 : f32
    %34 = vector.broadcast %cst_21 : f32 to vector<2x256xf32>
    %35 = vector.broadcast %32 : vector<16x1xf32> to vector<16x16xf32>
    %36 = arith.mulf %10, %35 : vector<16x16xf32>
    %37 = vector.broadcast %33 : vector<1x16xf32> to vector<16x16xf32>
    %38 = arith.mulf %36, %37 : vector<16x16xf32>
    %cst_22 = arith.constant dense<0.000000e+00> : vector<16xf32>
    %39 = vector.multi_reduction <add>, %38, %cst_22 [1] : vector<16x16xf32> to vector<16xf32>
    %40 = vector.shape_cast %39 : vector<16xf32> to vector<16x1xf32>
    %cst_23 = arith.constant 1.000000e+00 : f32
    %41 = vector.broadcast %cst_23 : f32 to vector<16x1xf32>
    %42 = arith.maximumf %40, %41 : vector<16x1xf32>
    %43 = vector.broadcast %42 : vector<16x1xf32> to vector<16x16xf32>
    %44 = arith.divf %38, %43 : vector<16x16xf32>
    %45 = arith.truncf %44 : vector<16x16xf32> to vector<16x16xbf16>
    %46 = arith.truncf %9 : vector<16x128xf32> to vector<16x128xbf16>
    %cst_24 = arith.constant dense<0.000000e+00> : vector<16x128xf32>
    %47 = tpu.matmul %45, %46, %cst_24 {dimension_numbers = #tpu.dot_dimension_numbers<[1], [0], [0], [1], [0, 0, 1, 1], [], []>} : vector<16x16xbf16>, vector<16x128xbf16>, vector<16x128xf32> -> vector<16x128xf32>
    %48 = arith.truncf %47 : vector<16x128xf32> to vector<16x128xbf16>
    %49 = arith.truncf %9 : vector<16x128xf32> to vector<16x128xbf16>
    %50 = tpu.concatenate %48, %49 in 1 : vector<16x128xbf16>, vector<16x128xbf16> -> vector<16x256xbf16>
    %c0_25 = arith.constant 0 : index
    %c0_26 = arith.constant 0 : index
    %51 = vector.load %arg5[%c0_25, %c0_26] : memref<256x128xbf16, #tpu.memory_space<vmem>>, vector<256x128xbf16>
    %cst_27 = arith.constant dense<0.000000e+00> : vector<16x128xf32>
    %52 = tpu.matmul %50, %51, %cst_27 {dimension_numbers = #tpu.dot_dimension_numbers<[1], [0], [0], [1], [0, 0, 1, 1], [], []>} : vector<16x256xbf16>, vector<256x128xbf16>, vector<16x128xf32> -> vector<16x128xf32>
    %c0_28 = arith.constant 0 : index
    %c0_29 = arith.constant 0 : index
    %53 = vector.load %arg6[%c0_28, %c0_29] : memref<1x128xf32, #tpu.memory_space<vmem>>, vector<1x128xf32>
    %54 = vector.broadcast %53 : vector<1x128xf32> to vector<16x128xf32>
    %55 = arith.addf %52, %54 : vector<16x128xf32>
    %cst_30 = arith.constant 0.000000e+00 : f32
    %56 = vector.broadcast %cst_30 : f32 to vector<16x128xf32>
    %57 = arith.maximumf %55, %56 : vector<16x128xf32>
    %c0_31 = arith.constant 0 : index
    %c0_32 = arith.constant 0 : index
    %58 = vector.load %arg7[%c0_31, %c0_32] : memref<1x128xf32, #tpu.memory_space<vmem>>, vector<1x128xf32>
    %59 = vector.broadcast %58 : vector<1x128xf32> to vector<16x128xf32>
    %60 = arith.mulf %57, %59 : vector<16x128xf32>
    %cst_33 = arith.constant dense<0.000000e+00> : vector<16xf32>
    %61 = vector.multi_reduction <add>, %60, %cst_33 [1] : vector<16x128xf32> to vector<16xf32>
    %62 = vector.shape_cast %61 : vector<16xf32> to vector<16x1xf32>
    %63 = math.tanh %62 : vector<16x1xf32>
    %64 = vector.broadcast %63 : vector<16x1xf32> to vector<16x16xf32>
    %65 = arith.mulf %64, %16 : vector<16x16xf32>
    %cst_34 = arith.constant dense<0.000000e+00> : vector<16xf32>
    %66 = vector.multi_reduction <add>, %65, %cst_34 [0] : vector<16x16xf32> to vector<16xf32>
    %67 = vector.shape_cast %66 : vector<16xf32> to vector<1x16xf32>
    %cst_35 = arith.constant 0.000000e+00 : f32
    %68 = vector.broadcast %cst_35 : f32 to vector<16x1xf32>
    %69 = arith.cmpf ogt, %32, %68 : vector<16x1xf32>
    %cst_36 = arith.constant -1.000000e+30 : f32
    %70 = vector.broadcast %cst_36 : f32 to vector<16x1xf32>
    %71 = arith.select %69, %63, %70 : vector<16x1xi1>, vector<16x1xf32>
    %cst_37 = arith.constant 0.000000e+00 : f32
    %72 = vector.broadcast %cst_37 : f32 to vector<1x16xf32>
    %73 = arith.cmpf ogt, %33, %72 : vector<1x16xf32>
    %cst_38 = arith.constant -1.000000e+30 : f32
    %74 = vector.broadcast %cst_38 : f32 to vector<1x16xf32>
    %75 = arith.select %73, %67, %74 : vector<1x16xi1>, vector<1x16xf32>
    %76 = vector.broadcast %32 : vector<16x1xf32> to vector<16x16xf32>
    %77 = arith.mulf %24, %76 : vector<16x16xf32>
    %78 = vector.broadcast %33 : vector<1x16xf32> to vector<16x16xf32>
    %79 = arith.mulf %77, %78 : vector<16x16xf32>
    %80 = vector.broadcast %75 : vector<1x16xf32> to vector<16x16xf32>
    %81 = vector.broadcast %71 : vector<16x1xf32> to vector<16x16xf32>
    %82 = arith.cmpf ogt, %80, %81 : vector<16x16xf32>
    %83 = vector.broadcast %75 : vector<1x16xf32> to vector<16x16xf32>
    %84 = vector.broadcast %71 : vector<16x1xf32> to vector<16x16xf32>
    %85 = arith.cmpf oeq, %83, %84 : vector<16x16xf32>
    %86 = arith.cmpi slt, %12, %11 : vector<16x16xi32>
    %87 = arith.andi %85, %86 : vector<16x16xi1>
    %88 = arith.ori %82, %87 : vector<16x16xi1>
    %cst_39 = arith.constant 1.000000e+00 : f32
    %cst_40 = arith.constant 0.000000e+00 : f32
    %89 = vector.broadcast %cst_39 : f32 to vector<16x16xf32>
    %90 = vector.broadcast %cst_40 : f32 to vector<16x16xf32>
    %91 = arith.select %88, %89, %90 : vector<16x16xi1>, vector<16x16xf32>
    %92 = arith.mulf %79, %91 : vector<16x16xf32>
    %cst_41 = arith.constant dense<0.000000e+00> : vector<16xf32>
    %93 = vector.multi_reduction <add>, %92, %cst_41 [1] : vector<16x16xf32> to vector<16xf32>
    %94 = vector.shape_cast %93 : vector<16xf32> to vector<16x1xf32>
    %cst_42 = arith.constant dense<0.000000e+00> : vector<16xf32>
    %95 = vector.multi_reduction <add>, %79, %cst_42 [1] : vector<16x16xf32> to vector<16xf32>
    %96 = vector.shape_cast %95 : vector<16xf32> to vector<16x1xf32>
    %cst_43 = arith.constant 8.000000e-01 : f32
    %97 = vector.broadcast %cst_43 : f32 to vector<16x1xf32>
    %98 = arith.mulf %97, %96 : vector<16x1xf32>
    %99 = math.ceil %98 : vector<16x1xf32>
    %cst_44 = arith.constant 0.000000e+00 : f32
    %100 = vector.broadcast %cst_44 : f32 to vector<16x1xf32>
    %101 = arith.cmpf ogt, %32, %100 : vector<16x1xf32>
    %102 = arith.cmpf olt, %94, %99 : vector<16x1xf32>
    %103 = arith.andi %101, %102 : vector<16x1xi1>
    %cst_45 = arith.constant 1.000000e+00 : f32
    %cst_46 = arith.constant 0.000000e+00 : f32
    %104 = vector.broadcast %cst_45 : f32 to vector<16x1xf32>
    %105 = vector.broadcast %cst_46 : f32 to vector<16x1xf32>
    %106 = arith.select %103, %104, %105 : vector<16x1xi1>, vector<16x1xf32>
    %107 = vector.broadcast %106 : vector<16x1xf32> to vector<16x16xf32>
    %108 = arith.mulf %107, %16 : vector<16x16xf32>
    %cst_47 = arith.constant dense<0.000000e+00> : vector<16xf32>
    %109 = vector.multi_reduction <add>, %108, %cst_47 [0] : vector<16x16xf32> to vector<16xf32>
    %110 = vector.shape_cast %109 : vector<16xf32> to vector<1x16xf32>
    %111 = vector.broadcast %63 : vector<16x1xf32> to vector<16x128xf32>
    %112 = arith.mulf %57, %111 : vector<16x128xf32>
    %113 = vector.broadcast %106 : vector<16x1xf32> to vector<16x128xf32>
    %114 = arith.mulf %112, %113 : vector<16x128xf32>
    %115 = vector.broadcast %110 : vector<1x16xf32> to vector<2x16xf32>
    %116 = arith.mulf %31, %115 : vector<2x16xf32>
    %cst_48 = arith.constant dense<0.000000e+00> : vector<2xf32>
    %117 = vector.multi_reduction <add>, %116, %cst_48 [1] : vector<2x16xf32> to vector<2xf32>
    %118 = vector.shape_cast %117 : vector<2xf32> to vector<2x1xf32>
    %cst_49 = arith.constant dense<0.000000e+00> : vector<2x128xf32>
    %119 = tpu.matmul %116, %114, %cst_49 {dimension_numbers = #tpu.dot_dimension_numbers<[1], [0], [0], [1], [0, 0, 1, 1], [], []>} : vector<2x16xf32>, vector<16x128xf32>, vector<2x128xf32> -> vector<2x128xf32>
    %cst_50 = arith.constant 1.000000e+00 : f32
    %120 = vector.broadcast %cst_50 : f32 to vector<2x1xf32>
    %121 = arith.maximumf %118, %120 : vector<2x1xf32>
    %122 = vector.broadcast %121 : vector<2x1xf32> to vector<2x128xf32>
    %123 = arith.divf %119, %122 : vector<2x128xf32>
    %124 = vector.shape_cast %116 : vector<2x16xf32> to vector<2x16x1xf32>
    %cst_51 = arith.constant 0.000000e+00 : f32
    %125 = vector.broadcast %cst_51 : f32 to vector<2x16x1xf32>
    %126 = arith.cmpf ogt, %124, %125 : vector<2x16x1xf32>
    %127 = vector.shape_cast %114 : vector<16x128xf32> to vector<1x16x128xf32>
    %cst_52 = arith.constant -1.000000e+30 : f32
    %128 = vector.shape_cast %126 : vector<2x16x1xi1> to vector<2x16x1xi1>
    %129 = vector.broadcast %128 : vector<2x16x1xi1> to vector<2x16x128xi1>
    %130 = vector.shape_cast %127 : vector<1x16x128xf32> to vector<1x16x128xf32>
    %131 = vector.broadcast %130 : vector<1x16x128xf32> to vector<2x16x128xf32>
    %132 = vector.broadcast %cst_52 : f32 to vector<2x16x128xf32>
    %133 = arith.select %129, %131, %132 : vector<2x16x128xi1>, vector<2x16x128xf32>
    %cst_53 = arith.constant dense<0xFF800000> : vector<2x128xf32>
    %134 = vector.multi_reduction <maximumf>, %133, %cst_53 [1] : vector<2x16x128xf32> to vector<2x128xf32>
    %cst_54 = arith.constant 0.000000e+00 : f32
    %135 = vector.broadcast %cst_54 : f32 to vector<2x1xf32>
    %136 = arith.cmpf ogt, %118, %135 : vector<2x1xf32>
    %cst_55 = arith.constant 0.000000e+00 : f32
    %137 = vector.shape_cast %136 : vector<2x1xi1> to vector<2x1xi1>
    %138 = vector.broadcast %137 : vector<2x1xi1> to vector<2x128xi1>
    %139 = vector.broadcast %cst_55 : f32 to vector<2x128xf32>
    %140 = arith.select %138, %134, %139 : vector<2x128xi1>, vector<2x128xf32>
    %141 = tpu.concatenate %140, %123 in 1 : vector<2x128xf32>, vector<2x128xf32> -> vector<2x256xf32>
    %142 = arith.addf %34, %141 : vector<2x256xf32>
    %143 = vector.broadcast %106 : vector<16x1xf32> to vector<16x16xf32>
    %144 = arith.mulf %10, %143 : vector<16x16xf32>
    %145 = vector.broadcast %110 : vector<1x16xf32> to vector<16x16xf32>
    %146 = arith.mulf %144, %145 : vector<16x16xf32>
    %cst_56 = arith.constant dense<0.000000e+00> : vector<16xf32>
    %147 = vector.multi_reduction <add>, %146, %cst_56 [1] : vector<16x16xf32> to vector<16xf32>
    %148 = vector.shape_cast %147 : vector<16xf32> to vector<16x1xf32>
    %cst_57 = arith.constant 1.000000e+00 : f32
    %149 = vector.broadcast %cst_57 : f32 to vector<16x1xf32>
    %150 = arith.maximumf %148, %149 : vector<16x1xf32>
    %151 = vector.broadcast %150 : vector<16x1xf32> to vector<16x16xf32>
    %152 = arith.divf %146, %151 : vector<16x16xf32>
    %153 = arith.truncf %152 : vector<16x16xf32> to vector<16x16xbf16>
    %154 = arith.truncf %114 : vector<16x128xf32> to vector<16x128xbf16>
    %cst_58 = arith.constant dense<0.000000e+00> : vector<16x128xf32>
    %155 = tpu.matmul %153, %154, %cst_58 {dimension_numbers = #tpu.dot_dimension_numbers<[1], [0], [0], [1], [0, 0, 1, 1], [], []>} : vector<16x16xbf16>, vector<16x128xbf16>, vector<16x128xf32> -> vector<16x128xf32>
    %156 = arith.truncf %155 : vector<16x128xf32> to vector<16x128xbf16>
    %157 = arith.truncf %114 : vector<16x128xf32> to vector<16x128xbf16>
    %158 = tpu.concatenate %156, %157 in 1 : vector<16x128xbf16>, vector<16x128xbf16> -> vector<16x256xbf16>
    %c0_59 = arith.constant 0 : index
    %c0_60 = arith.constant 0 : index
    %159 = vector.load %arg8[%c0_59, %c0_60] : memref<256x128xbf16, #tpu.memory_space<vmem>>, vector<256x128xbf16>
    %cst_61 = arith.constant dense<0.000000e+00> : vector<16x128xf32>
    %160 = tpu.matmul %158, %159, %cst_61 {dimension_numbers = #tpu.dot_dimension_numbers<[1], [0], [0], [1], [0, 0, 1, 1], [], []>} : vector<16x256xbf16>, vector<256x128xbf16>, vector<16x128xf32> -> vector<16x128xf32>
    %c0_62 = arith.constant 0 : index
    %c0_63 = arith.constant 0 : index
    %161 = vector.load %arg9[%c0_62, %c0_63] : memref<1x128xf32, #tpu.memory_space<vmem>>, vector<1x128xf32>
    %162 = vector.broadcast %161 : vector<1x128xf32> to vector<16x128xf32>
    %163 = arith.addf %160, %162 : vector<16x128xf32>
    %cst_64 = arith.constant 0.000000e+00 : f32
    %164 = vector.broadcast %cst_64 : f32 to vector<16x128xf32>
    %165 = arith.maximumf %163, %164 : vector<16x128xf32>
    %c0_65 = arith.constant 0 : index
    %c0_66 = arith.constant 0 : index
    %166 = vector.load %arg10[%c0_65, %c0_66] : memref<1x128xf32, #tpu.memory_space<vmem>>, vector<1x128xf32>
    %167 = vector.broadcast %166 : vector<1x128xf32> to vector<16x128xf32>
    %168 = arith.mulf %165, %167 : vector<16x128xf32>
    %cst_67 = arith.constant dense<0.000000e+00> : vector<16xf32>
    %169 = vector.multi_reduction <add>, %168, %cst_67 [1] : vector<16x128xf32> to vector<16xf32>
    %170 = vector.shape_cast %169 : vector<16xf32> to vector<16x1xf32>
    %171 = math.tanh %170 : vector<16x1xf32>
    %172 = vector.broadcast %171 : vector<16x1xf32> to vector<16x16xf32>
    %173 = arith.mulf %172, %16 : vector<16x16xf32>
    %cst_68 = arith.constant dense<0.000000e+00> : vector<16xf32>
    %174 = vector.multi_reduction <add>, %173, %cst_68 [0] : vector<16x16xf32> to vector<16xf32>
    %175 = vector.shape_cast %174 : vector<16xf32> to vector<1x16xf32>
    %cst_69 = arith.constant 0.000000e+00 : f32
    %176 = vector.broadcast %cst_69 : f32 to vector<16x1xf32>
    %177 = arith.cmpf ogt, %106, %176 : vector<16x1xf32>
    %cst_70 = arith.constant -1.000000e+30 : f32
    %178 = vector.broadcast %cst_70 : f32 to vector<16x1xf32>
    %179 = arith.select %177, %171, %178 : vector<16x1xi1>, vector<16x1xf32>
    %cst_71 = arith.constant 0.000000e+00 : f32
    %180 = vector.broadcast %cst_71 : f32 to vector<1x16xf32>
    %181 = arith.cmpf ogt, %110, %180 : vector<1x16xf32>
    %cst_72 = arith.constant -1.000000e+30 : f32
    %182 = vector.broadcast %cst_72 : f32 to vector<1x16xf32>
    %183 = arith.select %181, %175, %182 : vector<1x16xi1>, vector<1x16xf32>
    %184 = vector.broadcast %106 : vector<16x1xf32> to vector<16x16xf32>
    %185 = arith.mulf %24, %184 : vector<16x16xf32>
    %186 = vector.broadcast %110 : vector<1x16xf32> to vector<16x16xf32>
    %187 = arith.mulf %185, %186 : vector<16x16xf32>
    %188 = vector.broadcast %183 : vector<1x16xf32> to vector<16x16xf32>
    %189 = vector.broadcast %179 : vector<16x1xf32> to vector<16x16xf32>
    %190 = arith.cmpf ogt, %188, %189 : vector<16x16xf32>
    %191 = vector.broadcast %183 : vector<1x16xf32> to vector<16x16xf32>
    %192 = vector.broadcast %179 : vector<16x1xf32> to vector<16x16xf32>
    %193 = arith.cmpf oeq, %191, %192 : vector<16x16xf32>
    %194 = arith.cmpi slt, %12, %11 : vector<16x16xi32>
    %195 = arith.andi %193, %194 : vector<16x16xi1>
    %196 = arith.ori %190, %195 : vector<16x16xi1>
    %cst_73 = arith.constant 1.000000e+00 : f32
    %cst_74 = arith.constant 0.000000e+00 : f32
    %197 = vector.broadcast %cst_73 : f32 to vector<16x16xf32>
    %198 = vector.broadcast %cst_74 : f32 to vector<16x16xf32>
    %199 = arith.select %196, %197, %198 : vector<16x16xi1>, vector<16x16xf32>
    %200 = arith.mulf %187, %199 : vector<16x16xf32>
    %cst_75 = arith.constant dense<0.000000e+00> : vector<16xf32>
    %201 = vector.multi_reduction <add>, %200, %cst_75 [1] : vector<16x16xf32> to vector<16xf32>
    %202 = vector.shape_cast %201 : vector<16xf32> to vector<16x1xf32>
    %cst_76 = arith.constant dense<0.000000e+00> : vector<16xf32>
    %203 = vector.multi_reduction <add>, %187, %cst_76 [1] : vector<16x16xf32> to vector<16xf32>
    %204 = vector.shape_cast %203 : vector<16xf32> to vector<16x1xf32>
    %cst_77 = arith.constant 8.000000e-01 : f32
    %205 = vector.broadcast %cst_77 : f32 to vector<16x1xf32>
    %206 = arith.mulf %205, %204 : vector<16x1xf32>
    %207 = math.ceil %206 : vector<16x1xf32>
    %cst_78 = arith.constant 0.000000e+00 : f32
    %208 = vector.broadcast %cst_78 : f32 to vector<16x1xf32>
    %209 = arith.cmpf ogt, %106, %208 : vector<16x1xf32>
    %210 = arith.cmpf olt, %202, %207 : vector<16x1xf32>
    %211 = arith.andi %209, %210 : vector<16x1xi1>
    %cst_79 = arith.constant 1.000000e+00 : f32
    %cst_80 = arith.constant 0.000000e+00 : f32
    %212 = vector.broadcast %cst_79 : f32 to vector<16x1xf32>
    %213 = vector.broadcast %cst_80 : f32 to vector<16x1xf32>
    %214 = arith.select %211, %212, %213 : vector<16x1xi1>, vector<16x1xf32>
    %215 = vector.broadcast %214 : vector<16x1xf32> to vector<16x16xf32>
    %216 = arith.mulf %215, %16 : vector<16x16xf32>
    %cst_81 = arith.constant dense<0.000000e+00> : vector<16xf32>
    %217 = vector.multi_reduction <add>, %216, %cst_81 [0] : vector<16x16xf32> to vector<16xf32>
    %218 = vector.shape_cast %217 : vector<16xf32> to vector<1x16xf32>
    %219 = vector.broadcast %171 : vector<16x1xf32> to vector<16x128xf32>
    %220 = arith.mulf %165, %219 : vector<16x128xf32>
    %221 = vector.broadcast %214 : vector<16x1xf32> to vector<16x128xf32>
    %222 = arith.mulf %220, %221 : vector<16x128xf32>
    %223 = vector.broadcast %218 : vector<1x16xf32> to vector<2x16xf32>
    %224 = arith.mulf %31, %223 : vector<2x16xf32>
    %cst_82 = arith.constant dense<0.000000e+00> : vector<2xf32>
    %225 = vector.multi_reduction <add>, %224, %cst_82 [1] : vector<2x16xf32> to vector<2xf32>
    %226 = vector.shape_cast %225 : vector<2xf32> to vector<2x1xf32>
    %cst_83 = arith.constant dense<0.000000e+00> : vector<2x128xf32>
    %227 = tpu.matmul %224, %222, %cst_83 {dimension_numbers = #tpu.dot_dimension_numbers<[1], [0], [0], [1], [0, 0, 1, 1], [], []>} : vector<2x16xf32>, vector<16x128xf32>, vector<2x128xf32> -> vector<2x128xf32>
    %cst_84 = arith.constant 1.000000e+00 : f32
    %228 = vector.broadcast %cst_84 : f32 to vector<2x1xf32>
    %229 = arith.maximumf %226, %228 : vector<2x1xf32>
    %230 = vector.broadcast %229 : vector<2x1xf32> to vector<2x128xf32>
    %231 = arith.divf %227, %230 : vector<2x128xf32>
    %232 = vector.shape_cast %224 : vector<2x16xf32> to vector<2x16x1xf32>
    %cst_85 = arith.constant 0.000000e+00 : f32
    %233 = vector.broadcast %cst_85 : f32 to vector<2x16x1xf32>
    %234 = arith.cmpf ogt, %232, %233 : vector<2x16x1xf32>
    %235 = vector.shape_cast %222 : vector<16x128xf32> to vector<1x16x128xf32>
    %cst_86 = arith.constant -1.000000e+30 : f32
    %236 = vector.shape_cast %234 : vector<2x16x1xi1> to vector<2x16x1xi1>
    %237 = vector.broadcast %236 : vector<2x16x1xi1> to vector<2x16x128xi1>
    %238 = vector.shape_cast %235 : vector<1x16x128xf32> to vector<1x16x128xf32>
    %239 = vector.broadcast %238 : vector<1x16x128xf32> to vector<2x16x128xf32>
    %240 = vector.broadcast %cst_86 : f32 to vector<2x16x128xf32>
    %241 = arith.select %237, %239, %240 : vector<2x16x128xi1>, vector<2x16x128xf32>
    %cst_87 = arith.constant dense<0xFF800000> : vector<2x128xf32>
    %242 = vector.multi_reduction <maximumf>, %241, %cst_87 [1] : vector<2x16x128xf32> to vector<2x128xf32>
    %cst_88 = arith.constant 0.000000e+00 : f32
    %243 = vector.broadcast %cst_88 : f32 to vector<2x1xf32>
    %244 = arith.cmpf ogt, %226, %243 : vector<2x1xf32>
    %cst_89 = arith.constant 0.000000e+00 : f32
    %245 = vector.shape_cast %244 : vector<2x1xi1> to vector<2x1xi1>
    %246 = vector.broadcast %245 : vector<2x1xi1> to vector<2x128xi1>
    %247 = vector.broadcast %cst_89 : f32 to vector<2x128xf32>
    %248 = arith.select %246, %242, %247 : vector<2x128xi1>, vector<2x128xf32>
    %249 = tpu.concatenate %248, %231 in 1 : vector<2x128xf32>, vector<2x128xf32> -> vector<2x256xf32>
    %250 = arith.addf %142, %249 : vector<2x256xf32>
    %251 = vector.broadcast %214 : vector<16x1xf32> to vector<16x16xf32>
    %252 = arith.mulf %10, %251 : vector<16x16xf32>
    %253 = vector.broadcast %218 : vector<1x16xf32> to vector<16x16xf32>
    %254 = arith.mulf %252, %253 : vector<16x16xf32>
    %cst_90 = arith.constant dense<0.000000e+00> : vector<16xf32>
    %255 = vector.multi_reduction <add>, %254, %cst_90 [1] : vector<16x16xf32> to vector<16xf32>
    %256 = vector.shape_cast %255 : vector<16xf32> to vector<16x1xf32>
    %cst_91 = arith.constant 1.000000e+00 : f32
    %257 = vector.broadcast %cst_91 : f32 to vector<16x1xf32>
    %258 = arith.maximumf %256, %257 : vector<16x1xf32>
    %259 = vector.broadcast %258 : vector<16x1xf32> to vector<16x16xf32>
    %260 = arith.divf %254, %259 : vector<16x16xf32>
    %261 = arith.truncf %260 : vector<16x16xf32> to vector<16x16xbf16>
    %262 = arith.truncf %222 : vector<16x128xf32> to vector<16x128xbf16>
    %cst_92 = arith.constant dense<0.000000e+00> : vector<16x128xf32>
    %263 = tpu.matmul %261, %262, %cst_92 {dimension_numbers = #tpu.dot_dimension_numbers<[1], [0], [0], [1], [0, 0, 1, 1], [], []>} : vector<16x16xbf16>, vector<16x128xbf16>, vector<16x128xf32> -> vector<16x128xf32>
    %264 = arith.truncf %263 : vector<16x128xf32> to vector<16x128xbf16>
    %265 = arith.truncf %222 : vector<16x128xf32> to vector<16x128xbf16>
    %266 = tpu.concatenate %264, %265 in 1 : vector<16x128xbf16>, vector<16x128xbf16> -> vector<16x256xbf16>
    %c0_93 = arith.constant 0 : index
    %c0_94 = arith.constant 0 : index
    %267 = vector.load %arg11[%c0_93, %c0_94] : memref<256x128xbf16, #tpu.memory_space<vmem>>, vector<256x128xbf16>
    %cst_95 = arith.constant dense<0.000000e+00> : vector<16x128xf32>
    %268 = tpu.matmul %266, %267, %cst_95 {dimension_numbers = #tpu.dot_dimension_numbers<[1], [0], [0], [1], [0, 0, 1, 1], [], []>} : vector<16x256xbf16>, vector<256x128xbf16>, vector<16x128xf32> -> vector<16x128xf32>
    %c0_96 = arith.constant 0 : index
    %c0_97 = arith.constant 0 : index
    %269 = vector.load %arg12[%c0_96, %c0_97] : memref<1x128xf32, #tpu.memory_space<vmem>>, vector<1x128xf32>
    %270 = vector.broadcast %269 : vector<1x128xf32> to vector<16x128xf32>
    %271 = arith.addf %268, %270 : vector<16x128xf32>
    %cst_98 = arith.constant 0.000000e+00 : f32
    %272 = vector.broadcast %cst_98 : f32 to vector<16x128xf32>
    %273 = arith.maximumf %271, %272 : vector<16x128xf32>
    %c0_99 = arith.constant 0 : index
    %c0_100 = arith.constant 0 : index
    %274 = vector.load %arg13[%c0_99, %c0_100] : memref<1x128xf32, #tpu.memory_space<vmem>>, vector<1x128xf32>
    %275 = vector.broadcast %274 : vector<1x128xf32> to vector<16x128xf32>
    %276 = arith.mulf %273, %275 : vector<16x128xf32>
    %cst_101 = arith.constant dense<0.000000e+00> : vector<16xf32>
    %277 = vector.multi_reduction <add>, %276, %cst_101 [1] : vector<16x128xf32> to vector<16xf32>
    %278 = vector.shape_cast %277 : vector<16xf32> to vector<16x1xf32>
    %279 = math.tanh %278 : vector<16x1xf32>
    %280 = vector.broadcast %279 : vector<16x1xf32> to vector<16x16xf32>
    %281 = arith.mulf %280, %16 : vector<16x16xf32>
    %cst_102 = arith.constant dense<0.000000e+00> : vector<16xf32>
    %282 = vector.multi_reduction <add>, %281, %cst_102 [0] : vector<16x16xf32> to vector<16xf32>
    %283 = vector.shape_cast %282 : vector<16xf32> to vector<1x16xf32>
    %cst_103 = arith.constant 0.000000e+00 : f32
    %284 = vector.broadcast %cst_103 : f32 to vector<16x1xf32>
    %285 = arith.cmpf ogt, %214, %284 : vector<16x1xf32>
    %cst_104 = arith.constant -1.000000e+30 : f32
    %286 = vector.broadcast %cst_104 : f32 to vector<16x1xf32>
    %287 = arith.select %285, %279, %286 : vector<16x1xi1>, vector<16x1xf32>
    %cst_105 = arith.constant 0.000000e+00 : f32
    %288 = vector.broadcast %cst_105 : f32 to vector<1x16xf32>
    %289 = arith.cmpf ogt, %218, %288 : vector<1x16xf32>
    %cst_106 = arith.constant -1.000000e+30 : f32
    %290 = vector.broadcast %cst_106 : f32 to vector<1x16xf32>
    %291 = arith.select %289, %283, %290 : vector<1x16xi1>, vector<1x16xf32>
    %292 = vector.broadcast %214 : vector<16x1xf32> to vector<16x16xf32>
    %293 = arith.mulf %24, %292 : vector<16x16xf32>
    %294 = vector.broadcast %218 : vector<1x16xf32> to vector<16x16xf32>
    %295 = arith.mulf %293, %294 : vector<16x16xf32>
    %296 = vector.broadcast %291 : vector<1x16xf32> to vector<16x16xf32>
    %297 = vector.broadcast %287 : vector<16x1xf32> to vector<16x16xf32>
    %298 = arith.cmpf ogt, %296, %297 : vector<16x16xf32>
    %299 = vector.broadcast %291 : vector<1x16xf32> to vector<16x16xf32>
    %300 = vector.broadcast %287 : vector<16x1xf32> to vector<16x16xf32>
    %301 = arith.cmpf oeq, %299, %300 : vector<16x16xf32>
    %302 = arith.cmpi slt, %12, %11 : vector<16x16xi32>
    %303 = arith.andi %301, %302 : vector<16x16xi1>
    %304 = arith.ori %298, %303 : vector<16x16xi1>
    %cst_107 = arith.constant 1.000000e+00 : f32
    %cst_108 = arith.constant 0.000000e+00 : f32
    %305 = vector.broadcast %cst_107 : f32 to vector<16x16xf32>
    %306 = vector.broadcast %cst_108 : f32 to vector<16x16xf32>
    %307 = arith.select %304, %305, %306 : vector<16x16xi1>, vector<16x16xf32>
    %308 = arith.mulf %295, %307 : vector<16x16xf32>
    %cst_109 = arith.constant dense<0.000000e+00> : vector<16xf32>
    %309 = vector.multi_reduction <add>, %308, %cst_109 [1] : vector<16x16xf32> to vector<16xf32>
    %310 = vector.shape_cast %309 : vector<16xf32> to vector<16x1xf32>
    %cst_110 = arith.constant dense<0.000000e+00> : vector<16xf32>
    %311 = vector.multi_reduction <add>, %295, %cst_110 [1] : vector<16x16xf32> to vector<16xf32>
    %312 = vector.shape_cast %311 : vector<16xf32> to vector<16x1xf32>
    %cst_111 = arith.constant 8.000000e-01 : f32
    %313 = vector.broadcast %cst_111 : f32 to vector<16x1xf32>
    %314 = arith.mulf %313, %312 : vector<16x1xf32>
    %315 = math.ceil %314 : vector<16x1xf32>
    %cst_112 = arith.constant 0.000000e+00 : f32
    %316 = vector.broadcast %cst_112 : f32 to vector<16x1xf32>
    %317 = arith.cmpf ogt, %214, %316 : vector<16x1xf32>
    %318 = arith.cmpf olt, %310, %315 : vector<16x1xf32>
    %319 = arith.andi %317, %318 : vector<16x1xi1>
    %cst_113 = arith.constant 1.000000e+00 : f32
    %cst_114 = arith.constant 0.000000e+00 : f32
    %320 = vector.broadcast %cst_113 : f32 to vector<16x1xf32>
    %321 = vector.broadcast %cst_114 : f32 to vector<16x1xf32>
    %322 = arith.select %319, %320, %321 : vector<16x1xi1>, vector<16x1xf32>
    %323 = vector.broadcast %322 : vector<16x1xf32> to vector<16x16xf32>
    %324 = arith.mulf %323, %16 : vector<16x16xf32>
    %cst_115 = arith.constant dense<0.000000e+00> : vector<16xf32>
    %325 = vector.multi_reduction <add>, %324, %cst_115 [0] : vector<16x16xf32> to vector<16xf32>
    %326 = vector.shape_cast %325 : vector<16xf32> to vector<1x16xf32>
    %327 = vector.broadcast %279 : vector<16x1xf32> to vector<16x128xf32>
    %328 = arith.mulf %273, %327 : vector<16x128xf32>
    %329 = vector.broadcast %322 : vector<16x1xf32> to vector<16x128xf32>
    %330 = arith.mulf %328, %329 : vector<16x128xf32>
    %331 = vector.broadcast %326 : vector<1x16xf32> to vector<2x16xf32>
    %332 = arith.mulf %31, %331 : vector<2x16xf32>
    %cst_116 = arith.constant dense<0.000000e+00> : vector<2xf32>
    %333 = vector.multi_reduction <add>, %332, %cst_116 [1] : vector<2x16xf32> to vector<2xf32>
    %334 = vector.shape_cast %333 : vector<2xf32> to vector<2x1xf32>
    %cst_117 = arith.constant dense<0.000000e+00> : vector<2x128xf32>
    %335 = tpu.matmul %332, %330, %cst_117 {dimension_numbers = #tpu.dot_dimension_numbers<[1], [0], [0], [1], [0, 0, 1, 1], [], []>} : vector<2x16xf32>, vector<16x128xf32>, vector<2x128xf32> -> vector<2x128xf32>
    %cst_118 = arith.constant 1.000000e+00 : f32
    %336 = vector.broadcast %cst_118 : f32 to vector<2x1xf32>
    %337 = arith.maximumf %334, %336 : vector<2x1xf32>
    %338 = vector.broadcast %337 : vector<2x1xf32> to vector<2x128xf32>
    %339 = arith.divf %335, %338 : vector<2x128xf32>
    %340 = vector.shape_cast %332 : vector<2x16xf32> to vector<2x16x1xf32>
    %cst_119 = arith.constant 0.000000e+00 : f32
    %341 = vector.broadcast %cst_119 : f32 to vector<2x16x1xf32>
    %342 = arith.cmpf ogt, %340, %341 : vector<2x16x1xf32>
    %343 = vector.shape_cast %330 : vector<16x128xf32> to vector<1x16x128xf32>
    %cst_120 = arith.constant -1.000000e+30 : f32
    %344 = vector.shape_cast %342 : vector<2x16x1xi1> to vector<2x16x1xi1>
    %345 = vector.broadcast %344 : vector<2x16x1xi1> to vector<2x16x128xi1>
    %346 = vector.shape_cast %343 : vector<1x16x128xf32> to vector<1x16x128xf32>
    %347 = vector.broadcast %346 : vector<1x16x128xf32> to vector<2x16x128xf32>
    %348 = vector.broadcast %cst_120 : f32 to vector<2x16x128xf32>
    %349 = arith.select %345, %347, %348 : vector<2x16x128xi1>, vector<2x16x128xf32>
    %cst_121 = arith.constant dense<0xFF800000> : vector<2x128xf32>
    %350 = vector.multi_reduction <maximumf>, %349, %cst_121 [1] : vector<2x16x128xf32> to vector<2x128xf32>
    %cst_122 = arith.constant 0.000000e+00 : f32
    %351 = vector.broadcast %cst_122 : f32 to vector<2x1xf32>
    %352 = arith.cmpf ogt, %334, %351 : vector<2x1xf32>
    %cst_123 = arith.constant 0.000000e+00 : f32
    %353 = vector.shape_cast %352 : vector<2x1xi1> to vector<2x1xi1>
    %354 = vector.broadcast %353 : vector<2x1xi1> to vector<2x128xi1>
    %355 = vector.broadcast %cst_123 : f32 to vector<2x128xf32>
    %356 = arith.select %354, %350, %355 : vector<2x128xi1>, vector<2x128xf32>
    %357 = tpu.concatenate %356, %339 in 1 : vector<2x128xf32>, vector<2x128xf32> -> vector<2x256xf32>
    %358 = arith.addf %250, %357 : vector<2x256xf32>
    %c0_124 = arith.constant 0 : index
    %c0_125 = arith.constant 0 : index
    %359 = vector.load %arg14[%c0_124, %c0_125] : memref<256x128xf32, #tpu.memory_space<vmem>>, vector<256x128xf32>
    %cst_126 = arith.constant dense<0.000000e+00> : vector<2x128xf32>
    %360 = tpu.matmul %358, %359, %cst_126 {dimension_numbers = #tpu.dot_dimension_numbers<[1], [0], [0], [1], [0, 0, 1, 1], [], []>} : vector<2x256xf32>, vector<256x128xf32>, vector<2x128xf32> -> vector<2x128xf32>
    %c0_127 = arith.constant 0 : index
    %c0_128 = arith.constant 0 : index
    %361 = vector.load %arg15[%c0_127, %c0_128] : memref<1x128xf32, #tpu.memory_space<vmem>>, vector<1x128xf32>
    %362 = vector.broadcast %361 : vector<1x128xf32> to vector<2x128xf32>
    %363 = arith.addf %360, %362 : vector<2x128xf32>
    %cst_129 = arith.constant 0.000000e+00 : f32
    %364 = vector.broadcast %cst_129 : f32 to vector<2x128xf32>
    %365 = arith.maximumf %363, %364 : vector<2x128xf32>
    %c0_130 = arith.constant 0 : index
    %c0_131 = arith.constant 0 : index
    %366 = vector.load %arg16[%c0_130, %c0_131] : memref<128x64xf32, #tpu.memory_space<vmem>>, vector<128x64xf32>
    %cst_132 = arith.constant dense<0.000000e+00> : vector<2x64xf32>
    %367 = tpu.matmul %365, %366, %cst_132 {dimension_numbers = #tpu.dot_dimension_numbers<[1], [0], [0], [1], [0, 0, 1, 1], [], []>} : vector<2x128xf32>, vector<128x64xf32>, vector<2x64xf32> -> vector<2x64xf32>
    %c0_133 = arith.constant 0 : index
    %c0_134 = arith.constant 0 : index
    %368 = vector.load %arg17[%c0_133, %c0_134] : memref<1x64xf32, #tpu.memory_space<vmem>>, vector<1x64xf32>
    %369 = vector.broadcast %368 : vector<1x64xf32> to vector<2x64xf32>
    %370 = arith.addf %367, %369 : vector<2x64xf32>
    %cst_135 = arith.constant 0.000000e+00 : f32
    %371 = vector.broadcast %cst_135 : f32 to vector<2x64xf32>
    %372 = arith.maximumf %370, %371 : vector<2x64xf32>
    %c0_136 = arith.constant 0 : index
    %c0_137 = arith.constant 0 : index
    %373 = vector.load %arg18[%c0_136, %c0_137] : memref<64x128xf32, #tpu.memory_space<vmem>>, vector<64x128xf32>
    %cst_138 = arith.constant dense<0.000000e+00> : vector<2x128xf32>
    %374 = tpu.matmul %372, %373, %cst_138 {dimension_numbers = #tpu.dot_dimension_numbers<[1], [0], [0], [1], [0, 0, 1, 1], [], []>} : vector<2x64xf32>, vector<64x128xf32>, vector<2x128xf32> -> vector<2x128xf32>
    %c0_139 = arith.constant 0 : index
    %c0_140 = arith.constant 0 : index
    %375 = vector.load %arg19[%c0_139, %c0_140] : memref<1x128xf32, #tpu.memory_space<vmem>>, vector<1x128xf32>
    %376 = vector.broadcast %375 : vector<1x128xf32> to vector<2x128xf32>
    %377 = arith.addf %374, %376 : vector<2x128xf32>
    %378 = arith.negf %377 : vector<2x128xf32>
    %379 = math.exp %378 : vector<2x128xf32>
    %cst_141 = arith.constant 1.000000e+00 : f32
    %380 = vector.broadcast %cst_141 : f32 to vector<2x128xf32>
    %381 = arith.addf %380, %379 : vector<2x128xf32>
    %382 = arith.divf %380, %381 : vector<2x128xf32>
    %c0_142 = arith.constant 0 : index
    %c0_143 = arith.constant 0 : index
    %383 = vector.load %arg20[%c0_142, %c0_143] : memref<2x128xf32, #tpu.memory_space<vmem>>, vector<2x128xf32>
    tpu.vector_store %arg20[%c0_142, %c0_143], %382 {strides = array<i32>} : memref<2x128xf32, #tpu.memory_space<vmem>>, vector<2x128xf32>,
    return
  }
}

</mosaic_0001>

<llo_original>
// kernel: net_forward.1
$region0: #{net_forward.1}
  #allocation0 [shape = 'u32[]', space=smem, size = 0x4, offset = 0x4, fixed_abs, tag = 'smem constant byte address 0x4 - core index']
  #allocation1 [shape = 'u32[144,128]{1,0:T(1,128)}', space=vmem, size = 0x12000, scoped, tag = 'internal scratch']
  %s0 = inlined_call_operand.vmem [shape: bf16[200,128], index: 0, kind: input, shape index: {}]
  %s1 = inlined_call_operand.vmem [shape: s32[16,1], index: 1, kind: input, shape index: {}]
  %s2 = inlined_call_operand.vmem [shape: f32[16,16], index: 2, kind: input, shape index: {}]
  %s3 = inlined_call_operand.vmem [shape: s32[16,1], index: 3, kind: input, shape index: {}]
  %s4 = inlined_call_operand.vmem [shape: s32[1,16], index: 4, kind: input, shape index: {}]
  %s5 = inlined_call_operand.vmem [shape: bf16[256,128], index: 5, kind: input, shape index: {}]
  %s6 = inlined_call_operand.vmem [shape: f32[1,128], index: 6, kind: input, shape index: {}]
  %s7 = inlined_call_operand.vmem [shape: f32[1,128], index: 7, kind: input, shape index: {}]
  %s8 = inlined_call_operand.vmem [shape: bf16[256,128], index: 8, kind: input, shape index: {}]
  %s9 = inlined_call_operand.vmem [shape: f32[1,128], index: 9, kind: input, shape index: {}]
  %s10 = inlined_call_operand.vmem [shape: f32[1,128], index: 10, kind: input, shape index: {}]
  %s11 = inlined_call_operand.vmem [shape: bf16[256,128], index: 11, kind: input, shape index: {}]
  %s12 = inlined_call_operand.vmem [shape: f32[1,128], index: 12, kind: input, shape index: {}]
  %s13 = inlined_call_operand.vmem [shape: f32[1,128], index: 13, kind: input, shape index: {}]
  %s14 = inlined_call_operand.vmem [shape: f32[256,128], index: 14, kind: input, shape index: {}]
  %s15 = inlined_call_operand.vmem [shape: f32[1,128], index: 15, kind: input, shape index: {}]
  %s16 = inlined_call_operand.vmem [shape: f32[128,64], index: 16, kind: input, shape index: {}]
  %s17 = inlined_call_operand.vmem [shape: f32[1,64], index: 17, kind: input, shape index: {}]
  %s18 = inlined_call_operand.vmem [shape: f32[64,128], index: 18, kind: input, shape index: {}]
  %s19 = inlined_call_operand.vmem [shape: f32[1,128], index: 19, kind: input, shape index: {}]
  %s20 = inlined_call_operand.vmem [shape: f32[2,128], index: 20, kind: output, shape index: {}]
  %s21 = sld [smem:[#allocation0]]
  $region90: #{net_forward.1} parent=0
    _
  %s23 = ssub.s32 1, %s21
  %s24 = scalar_select 0, %s23, %s21
  // Predicated region
  $region2: #{net_forward.1} parent=0 // pred_check
    _
  $region3: #{net_forward.1} parent=0 // pred_check_branch
    %26 = sbr.rel (0) target = $region5
  $region4: #{net_forward.1} parent=0 // pred_region
    _
  $region5: #{net_forward.1} parent=0 // pred_fallthru
    _
  // Predicated region
  $region6: #{net_forward.1} parent=0 // pred_check
    _
  $region7: #{net_forward.1} parent=0 // pred_check_branch
    %28 = sbr.rel (0) target = $region9
  $region8: #{net_forward.1} parent=0 // pred_region
    _
  $region9: #{net_forward.1} parent=0 // pred_fallthru
    _
  // Predicated region
  $region10: #{net_forward.1} parent=0 // pred_check
    _
  $region11: #{net_forward.1} parent=0 // pred_check_branch
    %30 = sbr.rel (0) target = $region13
  $region12: #{net_forward.1} parent=0 // pred_region
    _
  $region13: #{net_forward.1} parent=0 // pred_fallthru
    _
  // Predicated region
  $region14: #{net_forward.1} parent=0 // pred_check
    _
  $region15: #{net_forward.1} parent=0 // pred_check_branch
    %32 = sbr.rel (0) target = $region17
  $region16: #{net_forward.1} parent=0 // pred_region
    _
  $region17: #{net_forward.1} parent=0 // pred_fallthru
    _
  // Predicated region
  $region18: #{net_forward.1} parent=0 // pred_check
    _
  $region19: #{net_forward.1} parent=0 // pred_check_branch
    %34 = sbr.rel (0) target = $region21
  $region20: #{net_forward.1} parent=0 // pred_region
    _
  $region21: #{net_forward.1} parent=0 // pred_fallthru
    _
  // Predicated region
  $region22: #{net_forward.1} parent=0 // pred_check
    _
  $region23: #{net_forward.1} parent=0 // pred_check_branch
    %36 = sbr.rel (0) target = $region25
  $region24: #{net_forward.1} parent=0 // pred_region
    _
  $region25: #{net_forward.1} parent=0 // pred_fallthru
    _
  // Predicated region
  $region26: #{net_forward.1} parent=0 // pred_check
    _
  $region27: #{net_forward.1} parent=0 // pred_check_branch
    %38 = sbr.rel (0) target = $region29
  $region28: #{net_forward.1} parent=0 // pred_region
    _
  $region29: #{net_forward.1} parent=0 // pred_fallthru
    _
  // Predicated region
  $region30: #{net_forward.1} parent=0 // pred_check
    _
  $region31: #{net_forward.1} parent=0 // pred_check_branch
    %40 = sbr.rel (0) target = $region33
  $region32: #{net_forward.1} parent=0 // pred_region
    _
  $region33: #{net_forward.1} parent=0 // pred_fallthru
    _
  // Predicated region
  $region34: #{net_forward.1} parent=0 // pred_check
    _
  $region35: #{net_forward.1} parent=0 // pred_check_branch
    %42 = sbr.rel (0) target = $region37
  $region36: #{net_forward.1} parent=0 // pred_region
    _
  $region37: #{net_forward.1} parent=0 // pred_fallthru
    _
  // Predicated region
  $region38: #{net_forward.1} parent=0 // pred_check
    _
  $region39: #{net_forward.1} parent=0 // pred_check_branch
    %44 = sbr.rel (0) target = $region41
  $region40: #{net_forward.1} parent=0 // pred_region
    _
  $region41: #{net_forward.1} parent=0 // pred_fallthru
    _
  // Predicated region
  $region42: #{net_forward.1} parent=0 // pred_check
    _
  $region43: #{net_forward.1} parent=0 // pred_check_branch
    %46 = sbr.rel (0) target = $region45
  $region44: #{net_forward.1} parent=0 // pred_region
    _
  $region45: #{net_forward.1} parent=0 // pred_fallthru
    _
  // Predicated region
  $region46: #{net_forward.1} parent=0 // pred_check
    _
  $region47: #{net_forward.1} parent=0 // pred_check_branch
    %48 = sbr.rel (0) target = $region49
  $region48: #{net_forward.1} parent=0 // pred_region
    _
  $region49: #{net_forward.1} parent=0 // pred_fallthru
    _
  // Predicated region
  $region50: #{net_forward.1} parent=0 // pred_check
    _
  $region51: #{net_forward.1} parent=0 // pred_check_branch
    %50 = sbr.rel (0) target = $region53
  $region52: #{net_forward.1} parent=0 // pred_region
    _
  $region53: #{net_forward.1} parent=0 // pred_fallthru
    _
  // Predicated region
  $region54: #{net_forward.1} parent=0 // pred_check
    _
  $region55: #{net_forward.1} parent=0 // pred_check_branch
    %52 = sbr.rel (0) target = $region57
  $region56: #{net_forward.1} parent=0 // pred_region
    _
  $region57: #{net_forward.1} parent=0 // pred_fallthru
    _
  // Predicated region
  $region58: #{net_forward.1} parent=0 // pred_check
    _
  $region59: #{net_forward.1} parent=0 // pred_check_branch
    %54 = sbr.rel (0) target = $region61
  $region60: #{net_forward.1} parent=0 // pred_region
    _
  $region61: #{net_forward.1} parent=0 // pred_fallthru
    _
  // Predicated region
  $region62: #{net_forward.1} parent=0 // pred_check
    _
  $region63: #{net_forward.1} parent=0 // pred_check_branch
    %56 = sbr.rel (0) target = $region65
  $region64: #{net_forward.1} parent=0 // pred_region
    _
  $region65: #{net_forward.1} parent=0 // pred_fallthru
    _
  // Predicated region
  $region66: #{net_forward.1} parent=0 // pred_check
    _
  $region67: #{net_forward.1} parent=0 // pred_check_branch
    %58 = sbr.rel (0) target = $region69
  $region68: #{net_forward.1} parent=0 // pred_region
    _
  $region69: #{net_forward.1} parent=0 // pred_fallthru
    _
  // Predicated region
  $region70: #{net_forward.1} parent=0 // pred_check
    _
  $region71: #{net_forward.1} parent=0 // pred_check_branch
    %60 = sbr.rel (0) target = $region73
  $region72: #{net_forward.1} parent=0 // pred_region
    _
  $region73: #{net_forward.1} parent=0 // pred_fallthru
    _
  // Predicated region
  $region74: #{net_forward.1} parent=0 // pred_check
    _
  $region75: #{net_forward.1} parent=0 // pred_check_branch
    %62 = sbr.rel (0) target = $region77
  $region76: #{net_forward.1} parent=0 // pred_region
    _
  $region77: #{net_forward.1} parent=0 // pred_fallthru
    _
  // Predicated region
  $region78: #{net_forward.1} parent=0 // pred_check
    _
  $region79: #{net_forward.1} parent=0 // pred_check_branch
    %64 = sbr.rel (0) target = $region81
  $region80: #{net_forward.1} parent=0 // pred_region
    _
  $region81: #{net_forward.1} parent=0 // pred_fallthru
    _
  %v66 = vlaneseq
  %v67 = vand.u32 %v66, 127
  %v68 = vadd.s32 %v67, 128
  %v69 = vld [vmem:[%s1] sm:$0xff]
  %v70 = vld [vmem:[%s1 + $0x8] sm:$0xff]
  %71 = vset.pattern.permute.xlu0 0
  %72 = vperm.xlu0 %71, %v69
  %v73 = vpop.permute.xlu0 %72
  %74 = vset.pattern.permute.xlu0 0
  %75 = vperm.xlu0 %74, %v70
  %v76 = vpop.permute.xlu0 %75
  %vm77 = vcmp.eq.s32.totalorder %v73, %v67
  %vm78 = vcmp.eq.s32.totalorder %v73, %v68
  %vm79 = vcmp.eq.s32.totalorder %v76, %v67
  %vm80 = vcmp.eq.s32.totalorder %v76, %v68
  %v81 = vsel %vm77, 1.0, 0.0
  %v82 = vsel %vm78, 1.0, 0.0
  %v83 = vsel %vm79, 1.0, 0.0
  %v84 = vsel %vm80, 1.0, 0.0
  %v85 = vpack.c.bf16 %v83, %v81
  %v86 = vpack.c.bf16 %v84, %v82
  %v87 = vld [vmem:[%s0] sm:$0xf]
  %v88 = vld [vmem:[%s0 + $0x4] sm:$0xf]
  %v89 = vld [vmem:[%s0 + $0x8] sm:$0xf]
  %v90 = vld [vmem:[%s0 + $0xc] sm:$0xf]
  %v91 = vld [vmem:[%s0 + $0x10] sm:$0xf]
  %v92 = vld [vmem:[%s0 + $0x14] sm:$0xf]
  %v93 = vld [vmem:[%s0 + $0x18] sm:$0xf]
  %v94 = vld [vmem:[%s0 + $0x1c] sm:$0xf]
  %v95 = vld [vmem:[%s0 + $0x20] sm:$0xf]
  %v96 = vld [vmem:[%s0 + $0x24] sm:$0xf]
  %v97 = vld [vmem:[%s0 + $0x28] sm:$0xf]
  %v98 = vld [vmem:[%s0 + $0x2c] sm:$0xf]
  %v99 = vld [vmem:[%s0 + $0x30] sm:$0xf]
  %v100 = vld [vmem:[%s0 + $0x34] sm:$0xf]
  %v101 = vld [vmem:[%s0 + $0x38] sm:$0xf]
  %v102 = vld [vmem:[%s0 + $0x3c] sm:$0xf]
  %v103 = vld [vmem:[%s0 + $0x40] sm:$0xf]
  %v104 = vld [vmem:[%s0 + $0x44] sm:$0xf]
  %v105 = vld [vmem:[%s0 + $0x48] sm:$0xf]
  %v106 = vld [vmem:[%s0 + $0x4c] sm:$0xf]
  %v107 = vld [vmem:[%s0 + $0x50] sm:$0xf]
  %v108 = vld [vmem:[%s0 + $0x54] sm:$0xf]
  %v109 = vld [vmem:[%s0 + $0x58] sm:$0xf]
  %v110 = vld [vmem:[%s0 + $0x5c] sm:$0xf]
  %v111 = vld [vmem:[%s0 + $0x60] sm:$0xf]
  %v137 = vunpack.c.l.b16 %v87
  %v138 = vunpack.c.l.b16 %v88
  %v139 = vunpack.c.l.b16 %v89
  %v140 = vunpack.c.l.b16 %v90
  %v141 = vunpack.c.l.b16 %v91
  %v142 = vunpack.c.l.b16 %v92
  %v143 = vunpack.c.l.b16 %v93
  %v144 = vunpack.c.l.b16 %v94
  %v145 = vunpack.c.l.b16 %v95
  %v146 = vunpack.c.l.b16 %v96
  %v147 = vunpack.c.l.b16 %v97
  %v148 = vunpack.c.l.b16 %v98
  %v149 = vunpack.c.l.b16 %v99
  %v150 = vunpack.c.l.b16 %v100
  %v151 = vunpack.c.l.b16 %v101
  %v152 = vunpack.c.l.b16 %v102
  %v153 = vunpack.c.l.b16 %v103
  %v154 = vunpack.c.l.b16 %v104
  %v155 = vunpack.c.l.b16 %v105
  %v156 = vunpack.c.l.b16 %v106
  %v157 = vunpack.c.l.b16 %v107
  %v158 = vunpack.c.l.b16 %v108
  %v159 = vunpack.c.l.b16 %v109
  %v160 = vunpack.c.l.b16 %v110
  %v161 = vunpack.c.l.b16 %v111
  %v162 = vpack.c.b16 %v138, %v137
  %v163 = vpack.c.b16 %v140, %v139
  %v164 = vpack.c.b16 %v142, %v141
  %v165 = vpack.c.b16 %v144, %v143
  %v166 = vpack.c.b16 %v146, %v145
  %v167 = vpack.c.b16 %v148, %v147
  %v168 = vpack.c.b16 %v150, %v149
  %v169 = vpack.c.b16 %v152, %v151
  %v170 = vpack.c.b16 %v154, %v153
  %v171 = vpack.c.b16 %v156, %v155
  %v172 = vpack.c.b16 %v158, %v157
  %v173 = vpack.c.b16 %v160, %v159
  %v174 = vpack.c.b16 %v161, %v161
  %vm187 = vcmask 588800
  %v189 = vsel %vm187, %v86, 0
  %vm191 = vcmask 1043456
  %v193 = vsel %vm191, %v174, 0
  %195 = vmatprep.subr.bf16.mxu0 0
  %196 = vmatpush1.bf16.msra.mxu0 %v162
  %197 = vmatprep.subr.bf16.mxu0 0
  %198 = vmatpush1.bf16.msra.mxu0 %v163
  %199 = vmatprep.subr.bf16.mxu0 0
  %200 = vmatpush1.bf16.msra.mxu0 %v164
  %201 = vmatprep.subr.bf16.mxu0 0
  %202 = vmatpush1.bf16.msra.mxu0 %v165
  %203 = vmatprep.subr.bf16.mxu0 0
  %204 = vmatpush1.bf16.msra.mxu0 %v166
  %205 = vmatprep.subr.bf16.mxu0 0
  %206 = vmatpush1.bf16.msra.mxu0 %v167
  %207 = vmatprep.subr.bf16.mxu0 0
  %208 = vmatpush1.bf16.msra.mxu0 %v168
  %209 = vmatprep.subr.bf16.mxu0 0
  %210 = vmatpush1.bf16.msra.mxu0 %v169
  %211 = vmatprep.subr.bf16.mxu0 0
  %212 = vmatpush1.bf16.msra.mxu0 %v170
  %213 = vmatprep.subr.bf16.mxu0 0
  %214 = vmatpush1.bf16.msra.mxu0 %v171
  %215 = vmatprep.subr.bf16.mxu0 0
  %216 = vmatpush1.bf16.msra.mxu0 %v172
  %217 = vmatprep.subr.bf16.mxu0 0
  %218 = vmatpush1.bf16.msra.mxu0 %v173
  %219 = vmatprep.subr.bf16.mxu0 0
  %220 = vmatpush1.bf16.msra.mxu0 %v193
  %221 = vmatprep.subr.bf16.mxu0 0
  %222 = vmatpush1.bf16.msra.mxu0 0
  %223 = vmatprep.subr.bf16.mxu0 0
  %224 = vmatpush1.bf16.msra.mxu0 0
  %225 = vmatprep.subr.bf16.mxu0 0
  %226 = vmatpush1.bf16.msra.mxu0 0
  %227 = vmatprep.mubr.bf16.mxu0 %v189
  %228 = vmatmul.mubr.bf16.gmra.mrb[0].mxu0 %v85
  %v229 = vpop.f32.mrb[0].mxu0
  %v230 = vadd.f32 0.0, %v229
  %v231 = vpop.f32.mrb[0].mxu0
  %v232 = vpop.f32.mrb[0].mxu0
  %v233 = vadd.f32 0.0, %v232
  %v234 = vpop.f32.mrb[0].mxu0
  %235 = vdwg.mxu0
  %v236 = vld [vmem:[%s2] sm:$0xff]
  %v237 = vld [vmem:[%s2 + $0x8] sm:$0xff]
  %v238 = vlaneseq
  %v239 = vshrl.u32 %v238, 7
  %v240 = vadd.s32 %v239, 8
  %vm241 = vcmp.eq.s32.totalorder %v239, %v67
  %vm242 = vcmp.eq.s32.totalorder %v240, %v67
  %v243 = vsel %vm241, 1.0, 0.0
  %v244 = vsel %vm242, 1.0, 0.0
  %v245 = vld [vmem:[%s3] sm:$0xff]
  %v246 = vld [vmem:[%s3 + $0x8] sm:$0xff]
  %v247 = vld [vmem:[%s4] sm:$0x1]
  %248 = vset.pattern.permute.xlu0 0
  %249 = vperm.xlu0 %248, %v245
  %v250 = vpop.permute.xlu0 %249
  %251 = vset.pattern.permute.xlu0 0
  %252 = vperm.xlu0 %251, %v246
  %v253 = vpop.permute.xlu0 %252
  %v254 = vlaneseq
  %v255 = vshrl.u32 %v254, 7
  %v256 = vsub.s32 0, %v255
  %v257 = vrot.slane %v247, %v256
  %vm258 = vcmp.eq.s32.totalorder %v250, %v257
  %vm259 = vcmp.eq.s32.totalorder %v253, %v257
  %v260 = vsel %vm258, 1.0, 0.0
  %v261 = vsel %vm259, 1.0, 0.0
  %vm262 = vcmp.eq.s32.totalorder %v257, %v239
  %v263 = vsel %vm262, 1.0, 0.0
  %vm264 = vcmask 130048
  %v265 = vsel %vm264, %v236, 0.0
  %266 = vadd.xlane.f32.xlu0 %v265
  %v267 = vpop.xlane.xlu0 %266
  %v268 = vsel %vm264, %v237, 0.0
  %269 = vadd.xlane.f32.xlu0 %v268
  %v270 = vpop.xlane.xlu0 %269
  %v271 = vmax.f32 %v267, 1.0
  %v272 = vmax.f32 %v270, 1.0
  %v273 = vrcp.pop %v271
  %v274 = vmul.f32 %v236, %v273
  %v275 = vrcp.pop %v272
  %v276 = vmul.f32 %v237, %v275
  %v277 = vpack.c.bf16 %v276, %v274
  %v278 = vpack.c.bf16 %v233, %v230
  %v280 = vsel %vm264, %v277, 0
  %282 = vmatprep.subr.bf16.mxu0 0
  %283 = vmatpush1.bf16.msra.mxu0 %v278
  %284 = vmatprep.subr.bf16.mxu0 0
  %285 = vmatpush1.bf16.msra.mxu0 0
  %286 = vmatprep.subr.bf16.mxu0 0
  %287 = vmatpush1.bf16.msra.mxu0 0
  %288 = vmatprep.subr.bf16.mxu0 0
  %289 = vmatpush1.bf16.msra.mxu0 0
  %290 = vmatprep.subr.bf16.mxu0 0
  %291 = vmatpush1.bf16.msra.mxu0 0
  %292 = vmatprep.subr.bf16.mxu0 0
  %293 = vmatpush1.bf16.msra.mxu0 0
  %294 = vmatprep.subr.bf16.mxu0 0
  %295 = vmatpush1.bf16.msra.mxu0 0
  %296 = vmatprep.subr.bf16.mxu0 0
  %297 = vmatpush1.bf16.msra.mxu0 0
  %298 = vmatprep.subr.bf16.mxu0 0
  %299 = vmatpush1.bf16.msra.mxu0 0
  %300 = vmatprep.subr.bf16.mxu0 0
  %301 = vmatpush1.bf16.msra.mxu0 0
  %302 = vmatprep.subr.bf16.mxu0 0
  %303 = vmatpush1.bf16.msra.mxu0 0
  %304 = vmatprep.subr.bf16.mxu0 0
  %305 = vmatpush1.bf16.msra.mxu0 0
  %306 = vmatprep.subr.bf16.mxu0 0
  %307 = vmatpush1.bf16.msra.mxu0 0
  %308 = vmatprep.subr.bf16.mxu0 0
  %309 = vmatpush1.bf16.msra.mxu0 0
  %310 = vmatprep.subr.bf16.mxu0 0
  %311 = vmatpush1.bf16.msra.mxu0 0
  %312 = vmatprep.subr.bf16.mxu0 0
  %313 = vmatpush1.bf16.msra.mxu0 0
  %314 = vmatprep.mubr.bf16.mxu0 0
  %315 = vmatmul.mubr.bf16.gmra.mrb[0].mxu0 %v280
  %v316 = vpop.f32.mrb[0].mxu0
  %v317 = vadd.f32 0.0, %v316
  %v318 = vpop.f32.mrb[0].mxu0
  %v319 = vpop.f32.mrb[0].mxu0
  %v320 = vadd.f32 0.0, %v319
  %v321 = vpop.f32.mrb[0].mxu0
  %322 = vdwg.mxu0
  %v323 = vpack.c.bf16 %v320, %v317
  %v324 = vld [vmem:[%s5] sm:$0xf]
  %v325 = vld [vmem:[%s5 + $0x4] sm:$0xf]
  %v326 = vld [vmem:[%s5 + $0x8] sm:$0xf]
  %v327 = vld [vmem:[%s5 + $0xc] sm:$0xf]
  %v328 = vld [vmem:[%s5 + $0x10] sm:$0xf]
  %v329 = vld [vmem:[%s5 + $0x14] sm:$0xf]
  %v330 = vld [vmem:[%s5 + $0x18] sm:$0xf]
  %v331 = vld [vmem:[%s5 + $0x1c] sm:$0xf]
  %v332 = vld [vmem:[%s5 + $0x20] sm:$0xf]
  %v333 = vld [vmem:[%s5 + $0x24] sm:$0xf]
  %v334 = vld [vmem:[%s5 + $0x28] sm:$0xf]
  %v335 = vld [vmem:[%s5 + $0x2c] sm:$0xf]
  %v336 = vld [vmem:[%s5 + $0x30] sm:$0xf]
  %v337 = vld [vmem:[%s5 + $0x34] sm:$0xf]
  %v338 = vld [vmem:[%s5 + $0x38] sm:$0xf]
  %v339 = vld [vmem:[%s5 + $0x3c] sm:$0xf]
  %v340 = vld [vmem:[%s5 + $0x40] sm:$0xf]
  %v341 = vld [vmem:[%s5 + $0x44] sm:$0xf]
  %v342 = vld [vmem:[%s5 + $0x48] sm:$0xf]
  %v343 = vld [vmem:[%s5 + $0x4c] sm:$0xf]
  %v344 = vld [vmem:[%s5 + $0x50] sm:$0xf]
  %v345 = vld [vmem:[%s5 + $0x54] sm:$0xf]
  %v346 = vld [vmem:[%s5 + $0x58] sm:$0xf]
  %v347 = vld [vmem:[%s5 + $0x5c] sm:$0xf]
  %v348 = vld [vmem:[%s5 + $0x60] sm:$0xf]
  %v349 = vld [vmem:[%s5 + $0x64] sm:$0xf]
  %v350 = vld [vmem:[%s5 + $0x68] sm:$0xf]
  %v351 = vld [vmem:[%s5 + $0x6c] sm:$0xf]
  %v352 = vld [vmem:[%s5 + $0x70] sm:$0xf]
  %v353 = vld [vmem:[%s5 + $0x74] sm:$0xf]
  %v354 = vld [vmem:[%s5 + $0x78] sm:$0xf]
  %v355 = vld [vmem:[%s5 + $0x7c] sm:$0xf]
  %v356 = vld [vmem:[%s6] sm:$0x1]
  %v358 = vlaneseq
  %v359 = vshrl.u32 %v358, 7
  %v360 = vsub.s32 0, %v359
  %v361 = vrot.slane %v356, %v360
  %v395 = vunpack.c.l.b16 %v324
  %v396 = vunpack.c.l.b16 %v325
  %v397 = vunpack.c.l.b16 %v326
  %v398 = vunpack.c.l.b16 %v327
  %v399 = vunpack.c.l.b16 %v328
  %v400 = vunpack.c.l.b16 %v329
  %v401 = vunpack.c.l.b16 %v330
  %v402 = vunpack.c.l.b16 %v331
  %v403 = vunpack.c.l.b16 %v332
  %v404 = vunpack.c.l.b16 %v333
  %v405 = vunpack.c.l.b16 %v334
  %v406 = vunpack.c.l.b16 %v335
  %v407 = vunpack.c.l.b16 %v336
  %v408 = vunpack.c.l.b16 %v337
  %v409 = vunpack.c.l.b16 %v338
  %v410 = vunpack.c.l.b16 %v339
  %v411 = vunpack.c.l.b16 %v340
  %v412 = vunpack.c.l.b16 %v341
  %v413 = vunpack.c.l.b16 %v342
  %v414 = vunpack.c.l.b16 %v343
  %v415 = vunpack.c.l.b16 %v344
  %v416 = vunpack.c.l.b16 %v345
  %v417 = vunpack.c.l.b16 %v346
  %v418 = vunpack.c.l.b16 %v347
  %v419 = vunpack.c.l.b16 %v348
  %v420 = vunpack.c.l.b16 %v349
  %v421 = vunpack.c.l.b16 %v350
  %v422 = vunpack.c.l.b16 %v351
  %v423 = vunpack.c.l.b16 %v352
  %v424 = vunpack.c.l.b16 %v353
  %v425 = vunpack.c.l.b16 %v354
  %v426 = vunpack.c.l.b16 %v355
  %v427 = vpack.c.b16 %v396, %v395
  %v428 = vpack.c.b16 %v398, %v397
  %v429 = vpack.c.b16 %v400, %v399
  %v430 = vpack.c.b16 %v402, %v401
  %v431 = vpack.c.b16 %v404, %v403
  %v432 = vpack.c.b16 %v406, %v405
  %v433 = vpack.c.b16 %v408, %v407
  %v434 = vpack.c.b16 %v410, %v409
  %v435 = vpack.c.b16 %v412, %v411
  %v436 = vpack.c.b16 %v414, %v413
  %v437 = vpack.c.b16 %v416, %v415
  %v438 = vpack.c.b16 %v418, %v417
  %v439 = vpack.c.b16 %v420, %v419
  %v440 = vpack.c.b16 %v422, %v421
  %v441 = vpack.c.b16 %v424, %v423
  %v442 = vpack.c.b16 %v426, %v425
  %459 = vmatprep.subr.bf16.mxu0 0
  %460 = vmatpush1.bf16.msra.mxu0 %v427
  %461 = vmatprep.subr.bf16.mxu0 0
  %462 = vmatpush1.bf16.msra.mxu0 %v428
  %463 = vmatprep.subr.bf16.mxu0 0
  %464 = vmatpush1.bf16.msra.mxu0 %v429
  %465 = vmatprep.subr.bf16.mxu0 0
  %466 = vmatpush1.bf16.msra.mxu0 %v430
  %467 = vmatprep.subr.bf16.mxu0 0
  %468 = vmatpush1.bf16.msra.mxu0 %v431
  %469 = vmatprep.subr.bf16.mxu0 0
  %470 = vmatpush1.bf16.msra.mxu0 %v432
  %471 = vmatprep.subr.bf16.mxu0 0
  %472 = vmatpush1.bf16.msra.mxu0 %v433
  %473 = vmatprep.subr.bf16.mxu0 0
  %474 = vmatpush1.bf16.msra.mxu0 %v434
  %475 = vmatprep.subr.bf16.mxu0 0
  %476 = vmatpush1.bf16.msra.mxu0 %v435
  %477 = vmatprep.subr.bf16.mxu0 0
  %478 = vmatpush1.bf16.msra.mxu0 %v436
  %479 = vmatprep.subr.bf16.mxu0 0
  %480 = vmatpush1.bf16.msra.mxu0 %v437
  %481 = vmatprep.subr.bf16.mxu0 0
  %482 = vmatpush1.bf16.msra.mxu0 %v438
  %483 = vmatprep.subr.bf16.mxu0 0
  %484 = vmatpush1.bf16.msra.mxu0 %v439
  %485 = vmatprep.subr.bf16.mxu0 0
  %486 = vmatpush1.bf16.msra.mxu0 %v440
  %487 = vmatprep.subr.bf16.mxu0 0
  %488 = vmatpush1.bf16.msra.mxu0 %v441
  %489 = vmatprep.subr.bf16.mxu0 0
  %490 = vmatpush1.bf16.msra.mxu0 %v442
  %491 = vmatprep.mubr.bf16.mxu0 %v278
  %492 = vmatmul.mubr.bf16.gmra.mrb[0].mxu0 %v323
  %v493 = vpop.f32.mrb[0].mxu0
  %v494 = vadd.f32 %v361, %v493
  %v495 = vpop.f32.mrb[0].mxu0
  %v496 = vpop.f32.mrb[0].mxu0
  %v497 = vadd.f32 %v361, %v496
  %v498 = vpop.f32.mrb[0].mxu0
  %499 = vdwg.mxu0
  %v500 = vmax.f32 %v494, 0.0
  %v501 = vmax.f32 %v497, 0.0
  %v502 = vld [vmem:[%s7] sm:$0x1]
  %v504 = vlaneseq
  %v505 = vshrl.u32 %v504, 7
  %v506 = vsub.s32 0, %v505
  %v507 = vrot.slane %v502, %v506
  %v509 = vmul.f32 %v500, %v507
  %v510 = vmul.f32 %v501, %v507
  %511 = vadd.xlane.f32.xlu0 %v509
  %v512 = vpop.xlane.xlu0 %511
  %513 = vadd.xlane.f32.xlu0 %v510
  %v514 = vpop.xlane.xlu0 %513
  %v515 = vtanh.pop %v512
  %v516 = vtanh.pop %v514
  %v517 = vmul.f32 %v515, %v243
  %v518 = vmul.f32 %v516, %v244
  %v519 = vsel %vm264, %v517, 0.0
  %v520 = vsel %vm264, %v518, 0.0
  %v521 = vadd.f32 %v519, %v520
  %v522 = vrot.slane %v521, 4
  %v523 = vadd.f32 %v521, %v522
  %v524 = vrot.slane %v523, 2
  %v525 = vadd.f32 %v523, %v524
  %v526 = vrot.slane %v525, 1
  %v527 = vadd.f32 %v525, %v526
  %vm528 = vcmp.gt.f32.partialorder 1.0, 0.0
  %v529 = vsel %vm528, %v515, -1e+30
  %v530 = vsel %vm528, %v516, -1e+30
  %v531 = vsel %vm528, %v527, -1e+30
  %vm532 = vcmp.gt.f32.partialorder %v531, %v529
  %vm533 = vcmp.gt.f32.partialorder %v531, %v530
  %vm534 = vcmp.eq.f32.partialorder %v531, %v529
  %vm535 = vcmp.eq.f32.partialorder %v531, %v530
  %vm536 = vcmp.lt.s32.totalorder %v67, %v239
  %vm537 = vcmp.lt.s32.totalorder %v67, %v240
  %vm538 = vmand %vm534, %vm536
  %vm539 = vmand %vm535, %vm537
  %vm540 = vmor %vm532, %vm538
  %vm541 = vmor %vm533, %vm539
  %v542 = vsel %vm540, 1.0, 0.0
  %v543 = vsel %vm541, 1.0, 0.0
  %v544 = vmul.f32 %v260, %v542
  %v545 = vmul.f32 %v261, %v543
  %v546 = vsel %vm264, %v544, 0.0
  %547 = vadd.xlane.f32.xlu0 %v546
  %v548 = vpop.xlane.xlu0 %547
  %v549 = vsel %vm264, %v545, 0.0
  %550 = vadd.xlane.f32.xlu0 %v549
  %v551 = vpop.xlane.xlu0 %550
  %v552 = vsel %vm264, %v260, 0.0
  %553 = vadd.xlane.f32.xlu0 %v552
  %v554 = vpop.xlane.xlu0 %553
  %v555 = vsel %vm264, %v261, 0.0
  %556 = vadd.xlane.f32.xlu0 %v555
  %v557 = vpop.xlane.xlu0 %556
  %v558 = vmul.f32 %v554, 0.8
  %v559 = vmul.f32 %v557, 0.8
  %v560 = vceil.f32 %v558
  %v561 = vceil.f32 %v559
  %vm562 = vcmp.lt.f32.partialorder %v548, %v560
  %vm563 = vcmp.lt.f32.partialorder %v551, %v561
  %vm564 = vmand %vm528, %vm562
  %vm565 = vmand %vm528, %vm563
  %v566 = vsel %vm564, 1.0, 0.0
  %v567 = vsel %vm565, 1.0, 0.0
  %v568 = vmul.f32 %v566, %v243
  %v569 = vmul.f32 %v567, %v244
  %v570 = vsel %vm264, %v568, 0.0
  %v571 = vsel %vm264, %v569, 0.0
  %v572 = vadd.f32 %v570, %v571
  %v573 = vrot.slane %v572, 4
  %v574 = vadd.f32 %v572, %v573
  %v575 = vrot.slane %v574, 2
  %v576 = vadd.f32 %v574, %v575
  %v577 = vrot.slane %v576, 1
  %v578 = vadd.f32 %v576, %v577
  %v579 = vmul.f32 %v500, %v515
  %v580 = vmul.f32 %v501, %v516
  %v581 = vmul.f32 %v579, %v566
  %v582 = vmul.f32 %v580, %v567
  %v583 = vmul.f32 %v263, %v578
  %vm584 = vcmask 123904
  %v585 = vsel %vm584, %v583, 0.0
  %586 = vadd.xlane.f32.xlu0 %v585
  %v587 = vpop.xlane.xlu0 %586
  %v589 = vsel %vm264, %v583, 0
  %591 = vmatprep.subr.mxu0 0.0
  %592 = vmatpush1.msra.mxu0 %v581
  %593 = vmatprep.subr.mxu0 0.0
  %594 = vmatpush1.msra.mxu0 %v582
  %595 = vmatprep.subr.mxu0 0.0
  %596 = vmatpush1.msra.mxu0 0.0
  %597 = vmatprep.subr.mxu0 0.0
  %598 = vmatpush1.msra.mxu0 0.0
  %599 = vmatprep.subr.mxu0 0.0
  %600 = vmatpush1.msra.mxu0 0.0
  %601 = vmatprep.subr.mxu0 0.0
  %602 = vmatpush1.msra.mxu0 0.0
  %603 = vmatprep.subr.mxu0 0.0
  %604 = vmatpush1.msra.mxu0 0.0
  %605 = vmatprep.subr.mxu0 0.0
  %606 = vmatpush1.msra.mxu0 0.0
  %607 = vmatprep.subr.mxu0 0.0
  %608 = vmatpush1.msra.mxu0 0.0
  %609 = vmatprep.subr.mxu0 0.0
  %610 = vmatpush1.msra.mxu0 0.0
  %611 = vmatprep.subr.mxu0 0.0
  %612 = vmatpush1.msra.mxu0 0.0
  %613 = vmatprep.subr.mxu0 0.0
  %614 = vmatpush1.msra.mxu0 0.0
  %615 = vmatprep.subr.mxu0 0.0
  %616 = vmatpush1.msra.mxu0 0.0
  %617 = vmatprep.subr.mxu0 0.0
  %618 = vmatpush1.msra.mxu0 0.0
  %619 = vmatprep.subr.mxu0 0.0
  %620 = vmatpush1.msra.mxu0 0.0
  %621 = vmatprep.subr.mxu0 0.0
  %622 = vmatpush1.msra.mxu0 0.0
  %623 = vmatprep.subr.mxu0 0.0
  %624 = vmatpush1.msra.mxu0 0.0
  %625 = vmatprep.subr.mxu0 0.0
  %626 = vmatpush1.msra.mxu0 0.0
  %627 = vmatprep.subr.mxu0 0.0
  %628 = vmatpush1.msra.mxu0 0.0
  %629 = vmatprep.subr.mxu0 0.0
  %630 = vmatpush1.msra.mxu0 0.0
  %631 = vmatprep.subr.mxu0 0.0
  %632 = vmatpush1.msra.mxu0 0.0
  %633 = vmatprep.subr.mxu0 0.0
  %634 = vmatpush1.msra.mxu0 0.0
  %635 = vmatprep.subr.mxu0 0.0
  %636 = vmatpush1.msra.mxu0 0.0
  %637 = vmatprep.subr.mxu0 0.0
  %638 = vmatpush1.msra.mxu0 0.0
  %639 = vmatprep.subr.mxu0 0.0
  %640 = vmatpush1.msra.mxu0 0.0
  %641 = vmatprep.subr.mxu0 0.0
  %642 = vmatpush1.msra.mxu0 0.0
  %643 = vmatprep.subr.mxu0 0.0
  %644 = vmatpush1.msra.mxu0 0.0
  %645 = vmatprep.subr.mxu0 0.0
  %646 = vmatpush1.msra.mxu0 0.0
  %647 = vmatprep.subr.mxu0 0.0
  %648 = vmatpush1.msra.mxu0 0.0
  %649 = vmatprep.subr.mxu0 0.0
  %650 = vmatpush1.msra.mxu0 0.0
  %651 = vmatprep.subr.mxu0 0.0
  %652 = vmatpush1.msra.mxu0 0.0
  %653 = vmatprep.subr.mxu0 0.0
  %654 = vmatpush1.msra.mxu0 0.0
  %655 = vmatprep.mubr.f32.mxu0 0.0
  %656 = vmatmul.mubr.f32.gmra.mrb[0].mxu0 %v589
  %v657 = vpop.f32.mrb[0].mxu0
  %v658 = vadd.f32 0.0, %v657
  %v659 = vpop.f32.mrb[0].mxu0
  %660 = vdwg.mxu0
  %v661 = vmax.f32 %v587, 1.0
  %v662 = vrcp.pop %v661
  %v663 = vmul.f32 %v658, %v662
  %v664 = vlaneseq
  %v665 = vshrl.u32 %v664, 7
  %v666 = vsub.s32 0, %v665
  %v667 = vrot.slane %v583, %v666
  %669 = vbcast.lane.b32.xlu0 %v667, 256
  %v670 = vpop.permute.xlu0 %669
  %s672 = sor.u32 256, 8
  %673 = vbcast.lane.b32.xlu0 %v667, %s672
  %v674 = vpop.permute.xlu0 %673
  %v675 = vlaneseq
  %v676 = vshrl.u32 %v675, 7
  %v677 = vsub.s32 1, %v676
  %v678 = vrot.slane %v583, %v677
  %680 = vbcast.lane.b32.xlu0 %v678, 256
  %v681 = vpop.permute.xlu0 %680
  %s683 = sor.u32 256, 8
  %684 = vbcast.lane.b32.xlu0 %v678, %s683
  %v685 = vpop.permute.xlu0 %684
  %vm686 = vcmp.gt.f32.partialorder %v670, 0.0
  %vm687 = vcmp.gt.f32.partialorder %v674, 0.0
  %vm688 = vcmp.gt.f32.partialorder %v681, 0.0
  %vm689 = vcmp.gt.f32.partialorder %v685, 0.0
  %v690 = vsel %vm686, 1, 0
  %v691 = vsel %vm687, 1, 0
  %v692 = vsel %vm688, 1, 0
  %v693 = vsel %vm689, 1, 0
  %vm694 = vcmp.eq.s32.totalorder %v690, 1
  %vm695 = vcmp.eq.s32.totalorder %v691, 1
  %vm696 = vcmp.eq.s32.totalorder %v692, 1
  %vm697 = vcmp.eq.s32.totalorder %v693, 1
  %v698 = vsel %vm694, %v581, -1e+30
  %v699 = vsel %vm695, %v582, -1e+30
  %v700 = vsel %vm696, %v581, -1e+30
  %v701 = vsel %vm697, %v582, -1e+30
  %v702 = vmax.f32 %v698, %v699
  %v703 = vrot.slane %v702, 4
  %v704 = vmax.f32 %v702, %v703
  %v705 = vrot.slane %v704, 2
  %v706 = vmax.f32 %v704, %v705
  %v707 = vrot.slane %v706, 1
  %v708 = vmax.f32 %v706, %v707
  %v709 = vmax.f32 %v700, %v701
  %v710 = vrot.slane %v709, 4
  %v711 = vmax.f32 %v709, %v710
  %v712 = vrot.slane %v711, 2
  %v713 = vmax.f32 %v711, %v712
  %v714 = vrot.slane %v713, 1
  %v715 = vmax.f32 %v713, %v714
  %vm716 = vcmp.gt.f32.partialorder %v587, 0.0
  %v717 = vsel %vm716, 1, 0
  %vm718 = vcmp.eq.s32.totalorder %v717, 1
  %vm721 = vcmask 1041409
  %v722 = vsel %vm721, %v715, %v708
  %v724 = vsel %vm718, %v722, 0.0
  %v725 = vadd.f32 %v724, 0.0
  %v726 = vadd.f32 %v663, 0.0
  %v727 = vmul.f32 %v236, %v566
  %v728 = vmul.f32 %v237, %v567
  %v729 = vmul.f32 %v727, %v578
  %v730 = vmul.f32 %v728, %v578
  %v731 = vsel %vm264, %v729, 0.0
  %732 = vadd.xlane.f32.xlu0 %v731
  %v733 = vpop.xlane.xlu0 %732
  %v734 = vsel %vm264, %v730, 0.0
  %735 = vadd.xlane.f32.xlu0 %v734
  %v736 = vpop.xlane.xlu0 %735
  %v737 = vmax.f32 %v733, 1.0
  %v738 = vmax.f32 %v736, 1.0
  %v739 = vrcp.pop %v737
  %v740 = vmul.f32 %v729, %v739
  %v741 = vrcp.pop %v738
  %v742 = vmul.f32 %v730, %v741
  %v743 = vpack.c.bf16 %v742, %v740
  %v744 = vpack.c.bf16 %v582, %v581
  %v746 = vsel %vm264, %v743, 0
  %748 = vmatprep.subr.bf16.mxu0 0
  %749 = vmatpush1.bf16.msra.mxu0 %v744
  %750 = vmatprep.subr.bf16.mxu0 0
  %751 = vmatpush1.bf16.msra.mxu0 0
  %752 = vmatprep.subr.bf16.mxu0 0
  %753 = vmatpush1.bf16.msra.mxu0 0
  %754 = vmatprep.subr.bf16.mxu0 0
  %755 = vmatpush1.bf16.msra.mxu0 0
  %756 = vmatprep.subr.bf16.mxu0 0
  %757 = vmatpush1.bf16.msra.mxu0 0
  %758 = vmatprep.subr.bf16.mxu0 0
  %759 = vmatpush1.bf16.msra.mxu0 0
  %760 = vmatprep.subr.bf16.mxu0 0
  %761 = vmatpush1.bf16.msra.mxu0 0
  %762 = vmatprep.subr.bf16.mxu0 0
  %763 = vmatpush1.bf16.msra.mxu0 0
  %764 = vmatprep.subr.bf16.mxu0 0
  %765 = vmatpush1.bf16.msra.mxu0 0
  %766 = vmatprep.subr.bf16.mxu0 0
  %767 = vmatpush1.bf16.msra.mxu0 0
  %768 = vmatprep.subr.bf16.mxu0 0
  %769 = vmatpush1.bf16.msra.mxu0 0
  %770 = vmatprep.subr.bf16.mxu0 0
  %771 = vmatpush1.bf16.msra.mxu0 0
  %772 = vmatprep.subr.bf16.mxu0 0
  %773 = vmatpush1.bf16.msra.mxu0 0
  %774 = vmatprep.subr.bf16.mxu0 0
  %775 = vmatpush1.bf16.msra.mxu0 0
  %776 = vmatprep.subr.bf16.mxu0 0
  %777 = vmatpush1.bf16.msra.mxu0 0
  %778 = vmatprep.subr.bf16.mxu0 0
  %779 = vmatpush1.bf16.msra.mxu0 0
  %780 = vmatprep.mubr.bf16.mxu0 0
  %781 = vmatmul.mubr.bf16.gmra.mrb[0].mxu0 %v746
  %v782 = vpop.f32.mrb[0].mxu0
  %v783 = vadd.f32 0.0, %v782
  %v784 = vpop.f32.mrb[0].mxu0
  %v785 = vpop.f32.mrb[0].mxu0
  %v786 = vadd.f32 0.0, %v785
  %v787 = vpop.f32.mrb[0].mxu0
  %788 = vdwg.mxu0
  %v789 = vpack.c.bf16 %v786, %v783
  %v790 = vld [vmem:[%s8] sm:$0xf]
  %v791 = vld [vmem:[%s8 + $0x4] sm:$0xf]
  %v792 = vld [vmem:[%s8 + $0x8] sm:$0xf]
  %v793 = vld [vmem:[%s8 + $0xc] sm:$0xf]
  %v794 = vld [vmem:[%s8 + $0x10] sm:$0xf]
  %v795 = vld [vmem:[%s8 + $0x14] sm:$0xf]
  %v796 = vld [vmem:[%s8 + $0x18] sm:$0xf]
  %v797 = vld [vmem:[%s8 + $0x1c] sm:$0xf]
  %v798 = vld [vmem:[%s8 + $0x20] sm:$0xf]
  %v799 = vld [vmem:[%s8 + $0x24] sm:$0xf]
  %v800 = vld [vmem:[%s8 + $0x28] sm:$0xf]
  %v801 = vld [vmem:[%s8 + $0x2c] sm:$0xf]
  %v802 = vld [vmem:[%s8 + $0x30] sm:$0xf]
  %v803 = vld [vmem:[%s8 + $0x34] sm:$0xf]
  %v804 = vld [vmem:[%s8 + $0x38] sm:$0xf]
  %v805 = vld [vmem:[%s8 + $0x3c] sm:$0xf]
  %v806 = vld [vmem:[%s8 + $0x40] sm:$0xf]
  %v807 = vld [vmem:[%s8 + $0x44] sm:$0xf]
  %v808 = vld [vmem:[%s8 + $0x48] sm:$0xf]
  %v809 = vld [vmem:[%s8 + $0x4c] sm:$0xf]
  %v810 = vld [vmem:[%s8 + $0x50] sm:$0xf]
  %v811 = vld [vmem:[%s8 + $0x54] sm:$0xf]
  %v812 = vld [vmem:[%s8 + $0x58] sm:$0xf]
  %v813 = vld [vmem:[%s8 + $0x5c] sm:$0xf]
  %v814 = vld [vmem:[%s8 + $0x60] sm:$0xf]
  %v815 = vld [vmem:[%s8 + $0x64] sm:$0xf]
  %v816 = vld [vmem:[%s8 + $0x68] sm:$0xf]
  %v817 = vld [vmem:[%s8 + $0x6c] sm:$0xf]
  %v818 = vld [vmem:[%s8 + $0x70] sm:$0xf]
  %v819 = vld [vmem:[%s8 + $0x74] sm:$0xf]
  %v820 = vld [vmem:[%s8 + $0x78] sm:$0xf]
  %v821 = vld [vmem:[%s8 + $0x7c] sm:$0xf]
  %v822 = vld [vmem:[%s9] sm:$0x1]
  %v824 = vlaneseq
  %v825 = vshrl.u32 %v824, 7
  %v826 = vsub.s32 0, %v825
  %v827 = vrot.slane %v822, %v826
  %v861 = vunpack.c.l.b16 %v790
  %v862 = vunpack.c.l.b16 %v791
  %v863 = vunpack.c.l.b16 %v792
  %v864 = vunpack.c.l.b16 %v793
  %v865 = vunpack.c.l.b16 %v794
  %v866 = vunpack.c.l.b16 %v795
  %v867 = vunpack.c.l.b16 %v796
  %v868 = vunpack.c.l.b16 %v797
  %v869 = vunpack.c.l.b16 %v798
  %v870 = vunpack.c.l.b16 %v799
  %v871 = vunpack.c.l.b16 %v800
  %v872 = vunpack.c.l.b16 %v801
  %v873 = vunpack.c.l.b16 %v802
  %v874 = vunpack.c.l.b16 %v803
  %v875 = vunpack.c.l.b16 %v804
  %v876 = vunpack.c.l.b16 %v805
  %v877 = vunpack.c.l.b16 %v806
  %v878 = vunpack.c.l.b16 %v807
  %v879 = vunpack.c.l.b16 %v808
  %v880 = vunpack.c.l.b16 %v809
  %v881 = vunpack.c.l.b16 %v810
  %v882 = vunpack.c.l.b16 %v811
  %v883 = vunpack.c.l.b16 %v812
  %v884 = vunpack.c.l.b16 %v813
  %v885 = vunpack.c.l.b16 %v814
  %v886 = vunpack.c.l.b16 %v815
  %v887 = vunpack.c.l.b16 %v816
  %v888 = vunpack.c.l.b16 %v817
  %v889 = vunpack.c.l.b16 %v818
  %v890 = vunpack.c.l.b16 %v819
  %v891 = vunpack.c.l.b16 %v820
  %v892 = vunpack.c.l.b16 %v821
  %v893 = vpack.c.b16 %v862, %v861
  %v894 = vpack.c.b16 %v864, %v863
  %v895 = vpack.c.b16 %v866, %v865
  %v896 = vpack.c.b16 %v868, %v867
  %v897 = vpack.c.b16 %v870, %v869
  %v898 = vpack.c.b16 %v872, %v871
  %v899 = vpack.c.b16 %v874, %v873
  %v900 = vpack.c.b16 %v876, %v875
  %v901 = vpack.c.b16 %v878, %v877
  %v902 = vpack.c.b16 %v880, %v879
  %v903 = vpack.c.b16 %v882, %v881
  %v904 = vpack.c.b16 %v884, %v883
  %v905 = vpack.c.b16 %v886, %v885
  %v906 = vpack.c.b16 %v888, %v887
  %v907 = vpack.c.b16 %v890, %v889
  %v908 = vpack.c.b16 %v892, %v891
  %925 = vmatprep.subr.bf16.mxu0 0
  %926 = vmatpush1.bf16.msra.mxu0 %v893
  %927 = vmatprep.subr.bf16.mxu0 0
  %928 = vmatpush1.bf16.msra.mxu0 %v894
  %929 = vmatprep.subr.bf16.mxu0 0
  %930 = vmatpush1.bf16.msra.mxu0 %v895
  %931 = vmatprep.subr.bf16.mxu0 0
  %932 = vmatpush1.bf16.msra.mxu0 %v896
  %933 = vmatprep.subr.bf16.mxu0 0
  %934 = vmatpush1.bf16.msra.mxu0 %v897
  %935 = vmatprep.subr.bf16.mxu0 0
  %936 = vmatpush1.bf16.msra.mxu0 %v898
  %937 = vmatprep.subr.bf16.mxu0 0
  %938 = vmatpush1.bf16.msra.mxu0 %v899
  %939 = vmatprep.subr.bf16.mxu0 0
  %940 = vmatpush1.bf16.msra.mxu0 %v900
  %941 = vmatprep.subr.bf16.mxu0 0
  %942 = vmatpush1.bf16.msra.mxu0 %v901
  %943 = vmatprep.subr.bf16.mxu0 0
  %944 = vmatpush1.bf16.msra.mxu0 %v902
  %945 = vmatprep.subr.bf16.mxu0 0
  %946 = vmatpush1.bf16.msra.mxu0 %v903
  %947 = vmatprep.subr.bf16.mxu0 0
  %948 = vmatpush1.bf16.msra.mxu0 %v904
  %949 = vmatprep.subr.bf16.mxu0 0
  %950 = vmatpush1.bf16.msra.mxu0 %v905
  %951 = vmatprep.subr.bf16.mxu0 0
  %952 = vmatpush1.bf16.msra.mxu0 %v906
  %953 = vmatprep.subr.bf16.mxu0 0
  %954 = vmatpush1.bf16.msra.mxu0 %v907
  %955 = vmatprep.subr.bf16.mxu0 0
  %956 = vmatpush1.bf16.msra.mxu0 %v908
  %957 = vmatprep.mubr.bf16.mxu0 %v744
  %958 = vmatmul.mubr.bf16.gmra.mrb[0].mxu0 %v789
  %v959 = vpop.f32.mrb[0].mxu0
  %v960 = vadd.f32 %v827, %v959
  %v961 = vpop.f32.mrb[0].mxu0
  %v962 = vpop.f32.mrb[0].mxu0
  %v963 = vadd.f32 %v827, %v962
  %v964 = vpop.f32.mrb[0].mxu0
  %965 = vdwg.mxu0
  %v966 = vmax.f32 %v960, 0.0
  %v967 = vmax.f32 %v963, 0.0
  %v968 = vld [vmem:[%s10] sm:$0x1]
  %v970 = vlaneseq
  %v971 = vshrl.u32 %v970, 7
  %v972 = vsub.s32 0, %v971
  %v973 = vrot.slane %v968, %v972
  %v975 = vmul.f32 %v966, %v973
  %v976 = vmul.f32 %v967, %v973
  %977 = vadd.xlane.f32.xlu0 %v975
  %v978 = vpop.xlane.xlu0 %977
  %979 = vadd.xlane.f32.xlu0 %v976
  %v980 = vpop.xlane.xlu0 %979
  %v981 = vtanh.pop %v978
  %v982 = vtanh.pop %v980
  %v983 = vmul.f32 %v981, %v243
  %v984 = vmul.f32 %v982, %v244
  %v985 = vsel %vm264, %v983, 0.0
  %v986 = vsel %vm264, %v984, 0.0
  %v987 = vadd.f32 %v985, %v986
  %v988 = vrot.slane %v987, 4
  %v989 = vadd.f32 %v987, %v988
  %v990 = vrot.slane %v989, 2
  %v991 = vadd.f32 %v989, %v990
  %v992 = vrot.slane %v991, 1
  %v993 = vadd.f32 %v991, %v992
  %vm994 = vcmp.gt.f32.partialorder %v566, 0.0
  %vm995 = vcmp.gt.f32.partialorder %v567, 0.0
  %v996 = vsel %vm994, %v981, -1e+30
  %v997 = vsel %vm995, %v982, -1e+30
  %vm998 = vcmp.gt.f32.partialorder %v578, 0.0
  %v999 = vsel %vm998, %v993, -1e+30
  %v1000 = vmul.f32 %v260, %v566
  %v1001 = vmul.f32 %v261, %v567
  %v1002 = vmul.f32 %v1000, %v578
  %v1003 = vmul.f32 %v1001, %v578
  %vm1004 = vcmp.gt.f32.partialorder %v999, %v996
  %vm1005 = vcmp.gt.f32.partialorder %v999, %v997
  %vm1006 = vcmp.eq.f32.partialorder %v999, %v996
  %vm1007 = vcmp.eq.f32.partialorder %v999, %v997
  %vm1008 = vmand %vm1006, %vm536
  %vm1009 = vmand %vm1007, %vm537
  %vm1010 = vmor %vm1004, %vm1008
  %vm1011 = vmor %vm1005, %vm1009
  %v1012 = vsel %vm1010, 1.0, 0.0
  %v1013 = vsel %vm1011, 1.0, 0.0
  %v1014 = vmul.f32 %v1002, %v1012
  %v1015 = vmul.f32 %v1003, %v1013
  %v1016 = vsel %vm264, %v1014, 0.0
  %1017 = vadd.xlane.f32.xlu0 %v1016
  %v1018 = vpop.xlane.xlu0 %1017
  %v1019 = vsel %vm264, %v1015, 0.0
  %1020 = vadd.xlane.f32.xlu0 %v1019
  %v1021 = vpop.xlane.xlu0 %1020
  %v1022 = vsel %vm264, %v1002, 0.0
  %1023 = vadd.xlane.f32.xlu0 %v1022
  %v1024 = vpop.xlane.xlu0 %1023
  %v1025 = vsel %vm264, %v1003, 0.0
  %1026 = vadd.xlane.f32.xlu0 %v1025
  %v1027 = vpop.xlane.xlu0 %1026
  %v1028 = vmul.f32 %v1024, 0.8
  %v1029 = vmul.f32 %v1027, 0.8
  %v1030 = vceil.f32 %v1028
  %v1031 = vceil.f32 %v1029
  %vm1032 = vcmp.lt.f32.partialorder %v1018, %v1030
  %vm1033 = vcmp.lt.f32.partialorder %v1021, %v1031
  %vm1034 = vmand %vm994, %vm1032
  %vm1035 = vmand %vm995, %vm1033
  %v1036 = vsel %vm1034, 1.0, 0.0
  %v1037 = vsel %vm1035, 1.0, 0.0
  %v1038 = vmul.f32 %v1036, %v243
  %v1039 = vmul.f32 %v1037, %v244
  %v1040 = vsel %vm264, %v1038, 0.0
  %v1041 = vsel %vm264, %v1039, 0.0
  %v1042 = vadd.f32 %v1040, %v1041
  %v1043 = vrot.slane %v1042, 4
  %v1044 = vadd.f32 %v1042, %v1043
  %v1045 = vrot.slane %v1044, 2
  %v1046 = vadd.f32 %v1044, %v1045
  %v1047 = vrot.slane %v1046, 1
  %v1048 = vadd.f32 %v1046, %v1047
  %v1049 = vmul.f32 %v966, %v981
  %v1050 = vmul.f32 %v967, %v982
  %v1051 = vmul.f32 %v1049, %v1036
  %v1052 = vmul.f32 %v1050, %v1037
  %v1053 = vmul.f32 %v263, %v1048
  %v1054 = vsel %vm584, %v1053, 0.0
  %1055 = vadd.xlane.f32.xlu0 %v1054
  %v1056 = vpop.xlane.xlu0 %1055
  %v1058 = vsel %vm264, %v1053, 0
  %1060 = vmatprep.subr.mxu0 0.0
  %1061 = vmatpush1.msra.mxu0 %v1051
  %1062 = vmatprep.subr.mxu0 0.0
  %1063 = vmatpush1.msra.mxu0 %v1052
  %1064 = vmatprep.subr.mxu0 0.0
  %1065 = vmatpush1.msra.mxu0 0.0
  %1066 = vmatprep.subr.mxu0 0.0
  %1067 = vmatpush1.msra.mxu0 0.0
  %1068 = vmatprep.subr.mxu0 0.0
  %1069 = vmatpush1.msra.mxu0 0.0
  %1070 = vmatprep.subr.mxu0 0.0
  %1071 = vmatpush1.msra.mxu0 0.0
  %1072 = vmatprep.subr.mxu0 0.0
  %1073 = vmatpush1.msra.mxu0 0.0
  %1074 = vmatprep.subr.mxu0 0.0
  %1075 = vmatpush1.msra.mxu0 0.0
  %1076 = vmatprep.subr.mxu0 0.0
  %1077 = vmatpush1.msra.mxu0 0.0
  %1078 = vmatprep.subr.mxu0 0.0
  %1079 = vmatpush1.msra.mxu0 0.0
  %1080 = vmatprep.subr.mxu0 0.0
  %1081 = vmatpush1.msra.mxu0 0.0
  %1082 = vmatprep.subr.mxu0 0.0
  %1083 = vmatpush1.msra.mxu0 0.0
  %1084 = vmatprep.subr.mxu0 0.0
  %1085 = vmatpush1.msra.mxu0 0.0
  %1086 = vmatprep.subr.mxu0 0.0
  %1087 = vmatpush1.msra.mxu0 0.0
  %1088 = vmatprep.subr.mxu0 0.0
  %1089 = vmatpush1.msra.mxu0 0.0
  %1090 = vmatprep.subr.mxu0 0.0
  %1091 = vmatpush1.msra.mxu0 0.0
  %1092 = vmatprep.subr.mxu0 0.0
  %1093 = vmatpush1.msra.mxu0 0.0
  %1094 = vmatprep.subr.mxu0 0.0
  %1095 = vmatpush1.msra.mxu0 0.0
  %1096 = vmatprep.subr.mxu0 0.0
  %1097 = vmatpush1.msra.mxu0 0.0
  %1098 = vmatprep.subr.mxu0 0.0
  %1099 = vmatpush1.msra.mxu0 0.0
  %1100 = vmatprep.subr.mxu0 0.0
  %1101 = vmatpush1.msra.mxu0 0.0
  %1102 = vmatprep.subr.mxu0 0.0
  %1103 = vmatpush1.msra.mxu0 0.0
  %1104 = vmatprep.subr.mxu0 0.0
  %1105 = vmatpush1.msra.mxu0 0.0
  %1106 = vmatprep.subr.mxu0 0.0
  %1107 = vmatpush1.msra.mxu0 0.0
  %1108 = vmatprep.subr.mxu0 0.0
  %1109 = vmatpush1.msra.mxu0 0.0
  %1110 = vmatprep.subr.mxu0 0.0
  %1111 = vmatpush1.msra.mxu0 0.0
  %1112 = vmatprep.subr.mxu0 0.0
  %1113 = vmatpush1.msra.mxu0 0.0
  %1114 = vmatprep.subr.mxu0 0.0
  %1115 = vmatpush1.msra.mxu0 0.0
  %1116 = vmatprep.subr.mxu0 0.0
  %1117 = vmatpush1.msra.mxu0 0.0
  %1118 = vmatprep.subr.mxu0 0.0
  %1119 = vmatpush1.msra.mxu0 0.0
  %1120 = vmatprep.subr.mxu0 0.0
  %1121 = vmatpush1.msra.mxu0 0.0
  %1122 = vmatprep.subr.mxu0 0.0
  %1123 = vmatpush1.msra.mxu0 0.0
  %1124 = vmatprep.mubr.f32.mxu0 0.0
  %1125 = vmatmul.mubr.f32.gmra.mrb[0].mxu0 %v1058
  %v1126 = vpop.f32.mrb[0].mxu0
  %v1127 = vadd.f32 0.0, %v1126
  %v1128 = vpop.f32.mrb[0].mxu0
  %1129 = vdwg.mxu0
  %v1130 = vmax.f32 %v1056, 1.0
  %v1131 = vrcp.pop %v1130
  %v1132 = vmul.f32 %v1127, %v1131
  %v1133 = vlaneseq
  %v1134 = vshrl.u32 %v1133, 7
  %v1135 = vsub.s32 0, %v1134
  %v1136 = vrot.slane %v1053, %v1135
  %1138 = vbcast.lane.b32.xlu0 %v1136, 256
  %v1139 = vpop.permute.xlu0 %1138
  %s1141 = sor.u32 256, 8
  %1142 = vbcast.lane.b32.xlu0 %v1136, %s1141
  %v1143 = vpop.permute.xlu0 %1142
  %v1144 = vlaneseq
  %v1145 = vshrl.u32 %v1144, 7
  %v1146 = vsub.s32 1, %v1145
  %v1147 = vrot.slane %v1053, %v1146
  %1149 = vbcast.lane.b32.xlu0 %v1147, 256
  %v1150 = vpop.permute.xlu0 %1149
  %s1152 = sor.u32 256, 8
  %1153 = vbcast.lane.b32.xlu0 %v1147, %s1152
  %v1154 = vpop.permute.xlu0 %1153
  %vm1155 = vcmp.gt.f32.partialorder %v1139, 0.0
  %vm1156 = vcmp.gt.f32.partialorder %v1143, 0.0
  %vm1157 = vcmp.gt.f32.partialorder %v1150, 0.0
  %vm1158 = vcmp.gt.f32.partialorder %v1154, 0.0
  %v1159 = vsel %vm1155, 1, 0
  %v1160 = vsel %vm1156, 1, 0
  %v1161 = vsel %vm1157, 1, 0
  %v1162 = vsel %vm1158, 1, 0
  %vm1163 = vcmp.eq.s32.totalorder %v1159, 1
  %vm1164 = vcmp.eq.s32.totalorder %v1160, 1
  %vm1165 = vcmp.eq.s32.totalorder %v1161, 1
  %vm1166 = vcmp.eq.s32.totalorder %v1162, 1
  %v1167 = vsel %vm1163, %v1051, -1e+30
  %v1168 = vsel %vm1164, %v1052, -1e+30
  %v1169 = vsel %vm1165, %v1051, -1e+30
  %v1170 = vsel %vm1166, %v1052, -1e+30
  %v1171 = vmax.f32 %v1167, %v1168
  %v1172 = vrot.slane %v1171, 4
  %v1173 = vmax.f32 %v1171, %v1172
  %v1174 = vrot.slane %v1173, 2
  %v1175 = vmax.f32 %v1173, %v1174
  %v1176 = vrot.slane %v1175, 1
  %v1177 = vmax.f32 %v1175, %v1176
  %v1178 = vmax.f32 %v1169, %v1170
  %v1179 = vrot.slane %v1178, 4
  %v1180 = vmax.f32 %v1178, %v1179
  %v1181 = vrot.slane %v1180, 2
  %v1182 = vmax.f32 %v1180, %v1181
  %v1183 = vrot.slane %v1182, 1
  %v1184 = vmax.f32 %v1182, %v1183
  %vm1185 = vcmp.gt.f32.partialorder %v1056, 0.0
  %v1186 = vsel %vm1185, 1, 0
  %vm1187 = vcmp.eq.s32.totalorder %v1186, 1
  %v1190 = vsel %vm721, %v1184, %v1177
  %v1192 = vsel %vm1187, %v1190, 0.0
  %v1193 = vadd.f32 %v725, %v1192
  %v1194 = vadd.f32 %v726, %v1132
  %v1195 = vmul.f32 %v236, %v1036
  %v1196 = vmul.f32 %v237, %v1037
  %v1197 = vmul.f32 %v1195, %v1048
  %v1198 = vmul.f32 %v1196, %v1048
  %v1199 = vsel %vm264, %v1197, 0.0
  %1200 = vadd.xlane.f32.xlu0 %v1199
  %v1201 = vpop.xlane.xlu0 %1200
  %v1202 = vsel %vm264, %v1198, 0.0
  %1203 = vadd.xlane.f32.xlu0 %v1202
  %v1204 = vpop.xlane.xlu0 %1203
  %v1205 = vmax.f32 %v1201, 1.0
  %v1206 = vmax.f32 %v1204, 1.0
  %v1207 = vrcp.pop %v1205
  %v1208 = vmul.f32 %v1197, %v1207
  %v1209 = vrcp.pop %v1206
  %v1210 = vmul.f32 %v1198, %v1209
  %v1211 = vpack.c.bf16 %v1210, %v1208
  %v1212 = vpack.c.bf16 %v1052, %v1051
  %v1214 = vsel %vm264, %v1211, 0
  %1216 = vmatprep.subr.bf16.mxu0 0
  %1217 = vmatpush1.bf16.msra.mxu0 %v1212
  %1218 = vmatprep.subr.bf16.mxu0 0
  %1219 = vmatpush1.bf16.msra.mxu0 0
  %1220 = vmatprep.subr.bf16.mxu0 0
  %1221 = vmatpush1.bf16.msra.mxu0 0
  %1222 = vmatprep.subr.bf16.mxu0 0
  %1223 = vmatpush1.bf16.msra.mxu0 0
  %1224 = vmatprep.subr.bf16.mxu0 0
  %1225 = vmatpush1.bf16.msra.mxu0 0
  %1226 = vmatprep.subr.bf16.mxu0 0
  %1227 = vmatpush1.bf16.msra.mxu0 0
  %1228 = vmatprep.subr.bf16.mxu0 0
  %1229 = vmatpush1.bf16.msra.mxu0 0
  %1230 = vmatprep.subr.bf16.mxu0 0
  %1231 = vmatpush1.bf16.msra.mxu0 0
  %1232 = vmatprep.subr.bf16.mxu0 0
  %1233 = vmatpush1.bf16.msra.mxu0 0
  %1234 = vmatprep.subr.bf16.mxu0 0
  %1235 = vmatpush1.bf16.msra.mxu0 0
  %1236 = vmatprep.subr.bf16.mxu0 0
  %1237 = vmatpush1.bf16.msra.mxu0 0
  %1238 = vmatprep.subr.bf16.mxu0 0
  %1239 = vmatpush1.bf16.msra.mxu0 0
  %1240 = vmatprep.subr.bf16.mxu0 0
  %1241 = vmatpush1.bf16.msra.mxu0 0
  %1242 = vmatprep.subr.bf16.mxu0 0
  %1243 = vmatpush1.bf16.msra.mxu0 0
  %1244 = vmatprep.subr.bf16.mxu0 0
  %1245 = vmatpush1.bf16.msra.mxu0 0
  %1246 = vmatprep.subr.bf16.mxu0 0
  %1247 = vmatpush1.bf16.msra.mxu0 0
  %1248 = vmatprep.mubr.bf16.mxu0 0
  %1249 = vmatmul.mubr.bf16.gmra.mrb[0].mxu0 %v1214
  %v1250 = vpop.f32.mrb[0].mxu0
  %v1251 = vadd.f32 0.0, %v1250
  %v1252 = vpop.f32.mrb[0].mxu0
  %v1253 = vpop.f32.mrb[0].mxu0
  %v1254 = vadd.f32 0.0, %v1253
  %v1255 = vpop.f32.mrb[0].mxu0
  %1256 = vdwg.mxu0
  %v1257 = vpack.c.bf16 %v1254, %v1251
  %v1258 = vld [vmem:[%s11] sm:$0xf]
  %v1259 = vld [vmem:[%s11 + $0x4] sm:$0xf]
  %v1260 = vld [vmem:[%s11 + $0x8] sm:$0xf]
  %v1261 = vld [vmem:[%s11 + $0xc] sm:$0xf]
  %v1262 = vld [vmem:[%s11 + $0x10] sm:$0xf]
  %v1263 = vld [vmem:[%s11 + $0x14] sm:$0xf]
  %v1264 = vld [vmem:[%s11 + $0x18] sm:$0xf]
  %v1265 = vld [vmem:[%s11 + $0x1c] sm:$0xf]
  %v1266 = vld [vmem:[%s11 + $0x20] sm:$0xf]
  %v1267 = vld [vmem:[%s11 + $0x24] sm:$0xf]
  %v1268 = vld [vmem:[%s11 + $0x28] sm:$0xf]
  %v1269 = vld [vmem:[%s11 + $0x2c] sm:$0xf]
  %v1270 = vld [vmem:[%s11 + $0x30] sm:$0xf]
  %v1271 = vld [vmem:[%s11 + $0x34] sm:$0xf]
  %v1272 = vld [vmem:[%s11 + $0x38] sm:$0xf]
  %v1273 = vld [vmem:[%s11 + $0x3c] sm:$0xf]
  %v1274 = vld [vmem:[%s11 + $0x40] sm:$0xf]
  %v1275 = vld [vmem:[%s11 + $0x44] sm:$0xf]
  %v1276 = vld [vmem:[%s11 + $0x48] sm:$0xf]
  %v1277 = vld [vmem:[%s11 + $0x4c] sm:$0xf]
  %v1278 = vld [vmem:[%s11 + $0x50] sm:$0xf]
  %v1279 = vld [vmem:[%s11 + $0x54] sm:$0xf]
  %v1280 = vld [vmem:[%s11 + $0x58] sm:$0xf]
  %v1281 = vld [vmem:[%s11 + $0x5c] sm:$0xf]
  %v1282 = vld [vmem:[%s11 + $0x60] sm:$0xf]
  %v1283 = vld [vmem:[%s11 + $0x64] sm:$0xf]
  %v1284 = vld [vmem:[%s11 + $0x68] sm:$0xf]
  %v1285 = vld [vmem:[%s11 + $0x6c] sm:$0xf]
  %v1286 = vld [vmem:[%s11 + $0x70] sm:$0xf]
  %v1287 = vld [vmem:[%s11 + $0x74] sm:$0xf]
  %v1288 = vld [vmem:[%s11 + $0x78] sm:$0xf]
  %v1289 = vld [vmem:[%s11 + $0x7c] sm:$0xf]
  %v1290 = vld [vmem:[%s12] sm:$0x1]
  %v1292 = vlaneseq
  %v1293 = vshrl.u32 %v1292, 7
  %v1294 = vsub.s32 0, %v1293
  %v1295 = vrot.slane %v1290, %v1294
  %v1329 = vunpack.c.l.b16 %v1258
  %v1330 = vunpack.c.l.b16 %v1259
  %v1331 = vunpack.c.l.b16 %v1260
  %v1332 = vunpack.c.l.b16 %v1261
  %v1333 = vunpack.c.l.b16 %v1262
  %v1334 = vunpack.c.l.b16 %v1263
  %v1335 = vunpack.c.l.b16 %v1264
  %v1336 = vunpack.c.l.b16 %v1265
  %v1337 = vunpack.c.l.b16 %v1266
  %v1338 = vunpack.c.l.b16 %v1267
  %v1339 = vunpack.c.l.b16 %v1268
  %v1340 = vunpack.c.l.b16 %v1269
  %v1341 = vunpack.c.l.b16 %v1270
  %v1342 = vunpack.c.l.b16 %v1271
  %v1343 = vunpack.c.l.b16 %v1272
  %v1344 = vunpack.c.l.b16 %v1273
  %v1345 = vunpack.c.l.b16 %v1274
  %v1346 = vunpack.c.l.b16 %v1275
  %v1347 = vunpack.c.l.b16 %v1276
  %v1348 = vunpack.c.l.b16 %v1277
  %v1349 = vunpack.c.l.b16 %v1278
  %v1350 = vunpack.c.l.b16 %v1279
  %v1351 = vunpack.c.l.b16 %v1280
  %v1352 = vunpack.c.l.b16 %v1281
  %v1353 = vunpack.c.l.b16 %v1282
  %v1354 = vunpack.c.l.b16 %v1283
  %v1355 = vunpack.c.l.b16 %v1284
  %v1356 = vunpack.c.l.b16 %v1285
  %v1357 = vunpack.c.l.b16 %v1286
  %v1358 = vunpack.c.l.b16 %v1287
  %v1359 = vunpack.c.l.b16 %v1288
  %v1360 = vunpack.c.l.b16 %v1289
  %v1361 = vpack.c.b16 %v1330, %v1329
  %v1362 = vpack.c.b16 %v1332, %v1331
  %v1363 = vpack.c.b16 %v1334, %v1333
  %v1364 = vpack.c.b16 %v1336, %v1335
  %v1365 = vpack.c.b16 %v1338, %v1337
  %v1366 = vpack.c.b16 %v1340, %v1339
  %v1367 = vpack.c.b16 %v1342, %v1341
  %v1368 = vpack.c.b16 %v1344, %v1343
  %v1369 = vpack.c.b16 %v1346, %v1345
  %v1370 = vpack.c.b16 %v1348, %v1347
  %v1371 = vpack.c.b16 %v1350, %v1349
  %v1372 = vpack.c.b16 %v1352, %v1351
  %v1373 = vpack.c.b16 %v1354, %v1353
  %v1374 = vpack.c.b16 %v1356, %v1355
  %v1375 = vpack.c.b16 %v1358, %v1357
  %v1376 = vpack.c.b16 %v1360, %v1359
  %1393 = vmatprep.subr.bf16.mxu0 0
  %1394 = vmatpush1.bf16.msra.mxu0 %v1361
  %1395 = vmatprep.subr.bf16.mxu0 0
  %1396 = vmatpush1.bf16.msra.mxu0 %v1362
  %1397 = vmatprep.subr.bf16.mxu0 0
  %1398 = vmatpush1.bf16.msra.mxu0 %v1363
  %1399 = vmatprep.subr.bf16.mxu0 0
  %1400 = vmatpush1.bf16.msra.mxu0 %v1364
  %1401 = vmatprep.subr.bf16.mxu0 0
  %1402 = vmatpush1.bf16.msra.mxu0 %v1365
  %1403 = vmatprep.subr.bf16.mxu0 0
  %1404 = vmatpush1.bf16.msra.mxu0 %v1366
  %1405 = vmatprep.subr.bf16.mxu0 0
  %1406 = vmatpush1.bf16.msra.mxu0 %v1367
  %1407 = vmatprep.subr.bf16.mxu0 0
  %1408 = vmatpush1.bf16.msra.mxu0 %v1368
  %1409 = vmatprep.subr.bf16.mxu0 0
  %1410 = vmatpush1.bf16.msra.mxu0 %v1369
  %1411 = vmatprep.subr.bf16.mxu0 0
  %1412 = vmatpush1.bf16.msra.mxu0 %v1370
  %1413 = vmatprep.subr.bf16.mxu0 0
  %1414 = vmatpush1.bf16.msra.mxu0 %v1371
  %1415 = vmatprep.subr.bf16.mxu0 0
  %1416 = vmatpush1.bf16.msra.mxu0 %v1372
  %1417 = vmatprep.subr.bf16.mxu0 0
  %1418 = vmatpush1.bf16.msra.mxu0 %v1373
  %1419 = vmatprep.subr.bf16.mxu0 0
  %1420 = vmatpush1.bf16.msra.mxu0 %v1374
  %1421 = vmatprep.subr.bf16.mxu0 0
  %1422 = vmatpush1.bf16.msra.mxu0 %v1375
  %1423 = vmatprep.subr.bf16.mxu0 0
  %1424 = vmatpush1.bf16.msra.mxu0 %v1376
  %1425 = vmatprep.mubr.bf16.mxu0 %v1212
  %1426 = vmatmul.mubr.bf16.gmra.mrb[0].mxu0 %v1257
  %v1427 = vpop.f32.mrb[0].mxu0
  %v1428 = vadd.f32 %v1295, %v1427
  %v1429 = vpop.f32.mrb[0].mxu0
  %v1430 = vpop.f32.mrb[0].mxu0
  %v1431 = vadd.f32 %v1295, %v1430
  %v1432 = vpop.f32.mrb[0].mxu0
  %1433 = vdwg.mxu0
  %v1434 = vmax.f32 %v1428, 0.0
  %v1435 = vmax.f32 %v1431, 0.0
  %v1436 = vld [vmem:[%s13] sm:$0x1]
  %v1438 = vlaneseq
  %v1439 = vshrl.u32 %v1438, 7
  %v1440 = vsub.s32 0, %v1439
  %v1441 = vrot.slane %v1436, %v1440
  %v1443 = vmul.f32 %v1434, %v1441
  %v1444 = vmul.f32 %v1435, %v1441
  %1445 = vadd.xlane.f32.xlu0 %v1443
  %v1446 = vpop.xlane.xlu0 %1445
  %1447 = vadd.xlane.f32.xlu0 %v1444
  %v1448 = vpop.xlane.xlu0 %1447
  %v1449 = vtanh.pop %v1446
  %v1450 = vtanh.pop %v1448
  %v1451 = vmul.f32 %v1449, %v243
  %v1452 = vmul.f32 %v1450, %v244
  %v1453 = vsel %vm264, %v1451, 0.0
  %v1454 = vsel %vm264, %v1452, 0.0
  %v1455 = vadd.f32 %v1453, %v1454
  %v1456 = vrot.slane %v1455, 4
  %v1457 = vadd.f32 %v1455, %v1456
  %v1458 = vrot.slane %v1457, 2
  %v1459 = vadd.f32 %v1457, %v1458
  %v1460 = vrot.slane %v1459, 1
  %v1461 = vadd.f32 %v1459, %v1460
  %vm1462 = vcmp.gt.f32.partialorder %v1036, 0.0
  %vm1463 = vcmp.gt.f32.partialorder %v1037, 0.0
  %v1464 = vsel %vm1462, %v1449, -1e+30
  %v1465 = vsel %vm1463, %v1450, -1e+30
  %vm1466 = vcmp.gt.f32.partialorder %v1048, 0.0
  %v1467 = vsel %vm1466, %v1461, -1e+30
  %v1468 = vmul.f32 %v260, %v1036
  %v1469 = vmul.f32 %v261, %v1037
  %v1470 = vmul.f32 %v1468, %v1048
  %v1471 = vmul.f32 %v1469, %v1048
  %vm1472 = vcmp.gt.f32.partialorder %v1467, %v1464
  %vm1473 = vcmp.gt.f32.partialorder %v1467, %v1465
  %vm1474 = vcmp.eq.f32.partialorder %v1467, %v1464
  %vm1475 = vcmp.eq.f32.partialorder %v1467, %v1465
  %vm1476 = vmand %vm1474, %vm536
  %vm1477 = vmand %vm1475, %vm537
  %vm1478 = vmor %vm1472, %vm1476
  %vm1479 = vmor %vm1473, %vm1477
  %v1480 = vsel %vm1478, 1.0, 0.0
  %v1481 = vsel %vm1479, 1.0, 0.0
  %v1482 = vmul.f32 %v1470, %v1480
  %v1483 = vmul.f32 %v1471, %v1481
  %v1484 = vsel %vm264, %v1482, 0.0
  %1485 = vadd.xlane.f32.xlu0 %v1484
  %v1486 = vpop.xlane.xlu0 %1485
  %v1487 = vsel %vm264, %v1483, 0.0
  %1488 = vadd.xlane.f32.xlu0 %v1487
  %v1489 = vpop.xlane.xlu0 %1488
  %v1490 = vsel %vm264, %v1470, 0.0
  %1491 = vadd.xlane.f32.xlu0 %v1490
  %v1492 = vpop.xlane.xlu0 %1491
  %v1493 = vsel %vm264, %v1471, 0.0
  %1494 = vadd.xlane.f32.xlu0 %v1493
  %v1495 = vpop.xlane.xlu0 %1494
  %v1496 = vmul.f32 %v1492, 0.8
  %v1497 = vmul.f32 %v1495, 0.8
  %v1498 = vceil.f32 %v1496
  %v1499 = vceil.f32 %v1497
  %vm1500 = vcmp.lt.f32.partialorder %v1486, %v1498
  %vm1501 = vcmp.lt.f32.partialorder %v1489, %v1499
  %vm1502 = vmand %vm1462, %vm1500
  %vm1503 = vmand %vm1463, %vm1501
  %v1504 = vsel %vm1502, 1.0, 0.0
  %v1505 = vsel %vm1503, 1.0, 0.0
  %v1506 = vmul.f32 %v1504, %v243
  %v1507 = vmul.f32 %v1505, %v244
  %v1508 = vsel %vm264, %v1506, 0.0
  %v1509 = vsel %vm264, %v1507, 0.0
  %v1510 = vadd.f32 %v1508, %v1509
  %v1511 = vrot.slane %v1510, 4
  %v1512 = vadd.f32 %v1510, %v1511
  %v1513 = vrot.slane %v1512, 2
  %v1514 = vadd.f32 %v1512, %v1513
  %v1515 = vrot.slane %v1514, 1
  %v1516 = vadd.f32 %v1514, %v1515
  %v1517 = vmul.f32 %v1434, %v1449
  %v1518 = vmul.f32 %v1435, %v1450
  %v1519 = vmul.f32 %v1517, %v1504
  %v1520 = vmul.f32 %v1518, %v1505
  %v1521 = vmul.f32 %v263, %v1516
  %v1522 = vsel %vm584, %v1521, 0.0
  %1523 = vadd.xlane.f32.xlu0 %v1522
  %v1524 = vpop.xlane.xlu0 %1523
  %v1526 = vsel %vm264, %v1521, 0
  %1528 = vmatprep.subr.mxu0 0.0
  %1529 = vmatpush1.msra.mxu0 %v1519
  %1530 = vmatprep.subr.mxu0 0.0
  %1531 = vmatpush1.msra.mxu0 %v1520
  %1532 = vmatprep.subr.mxu0 0.0
  %1533 = vmatpush1.msra.mxu0 0.0
  %1534 = vmatprep.subr.mxu0 0.0
  %1535 = vmatpush1.msra.mxu0 0.0
  %1536 = vmatprep.subr.mxu0 0.0
  %1537 = vmatpush1.msra.mxu0 0.0
  %1538 = vmatprep.subr.mxu0 0.0
  %1539 = vmatpush1.msra.mxu0 0.0
  %1540 = vmatprep.subr.mxu0 0.0
  %1541 = vmatpush1.msra.mxu0 0.0
  %1542 = vmatprep.subr.mxu0 0.0
  %1543 = vmatpush1.msra.mxu0 0.0
  %1544 = vmatprep.subr.mxu0 0.0
  %1545 = vmatpush1.msra.mxu0 0.0
  %1546 = vmatprep.subr.mxu0 0.0
  %1547 = vmatpush1.msra.mxu0 0.0
  %1548 = vmatprep.subr.mxu0 0.0
  %1549 = vmatpush1.msra.mxu0 0.0
  %1550 = vmatprep.subr.mxu0 0.0
  %1551 = vmatpush1.msra.mxu0 0.0
  %1552 = vmatprep.subr.mxu0 0.0
  %1553 = vmatpush1.msra.mxu0 0.0
  %1554 = vmatprep.subr.mxu0 0.0
  %1555 = vmatpush1.msra.mxu0 0.0
  %1556 = vmatprep.subr.mxu0 0.0
  %1557 = vmatpush1.msra.mxu0 0.0
  %1558 = vmatprep.subr.mxu0 0.0
  %1559 = vmatpush1.msra.mxu0 0.0
  %1560 = vmatprep.subr.mxu0 0.0
  %1561 = vmatpush1.msra.mxu0 0.0
  %1562 = vmatprep.subr.mxu0 0.0
  %1563 = vmatpush1.msra.mxu0 0.0
  %1564 = vmatprep.subr.mxu0 0.0
  %1565 = vmatpush1.msra.mxu0 0.0
  %1566 = vmatprep.subr.mxu0 0.0
  %1567 = vmatpush1.msra.mxu0 0.0
  %1568 = vmatprep.subr.mxu0 0.0
  %1569 = vmatpush1.msra.mxu0 0.0
  %1570 = vmatprep.subr.mxu0 0.0
  %1571 = vmatpush1.msra.mxu0 0.0
  %1572 = vmatprep.subr.mxu0 0.0
  %1573 = vmatpush1.msra.mxu0 0.0
  %1574 = vmatprep.subr.mxu0 0.0
  %1575 = vmatpush1.msra.mxu0 0.0
  %1576 = vmatprep.subr.mxu0 0.0
  %1577 = vmatpush1.msra.mxu0 0.0
  %1578 = vmatprep.subr.mxu0 0.0
  %1579 = vmatpush1.msra.mxu0 0.0
  %1580 = vmatprep.subr.mxu0 0.0
  %1581 = vmatpush1.msra.mxu0 0.0
  %1582 = vmatprep.subr.mxu0 0.0
  %1583 = vmatpush1.msra.mxu0 0.0
  %1584 = vmatprep.subr.mxu0 0.0
  %1585 = vmatpush1.msra.mxu0 0.0
  %1586 = vmatprep.subr.mxu0 0.0
  %1587 = vmatpush1.msra.mxu0 0.0
  %1588 = vmatprep.subr.mxu0 0.0
  %1589 = vmatpush1.msra.mxu0 0.0
  %1590 = vmatprep.subr.mxu0 0.0
  %1591 = vmatpush1.msra.mxu0 0.0
  %1592 = vmatprep.mubr.f32.mxu0 0.0
  %1593 = vmatmul.mubr.f32.gmra.mrb[0].mxu0 %v1526
  %v1594 = vpop.f32.mrb[0].mxu0
  %v1595 = vadd.f32 0.0, %v1594
  %v1596 = vpop.f32.mrb[0].mxu0
  %1597 = vdwg.mxu0
  %v1598 = vmax.f32 %v1524, 1.0
  %v1599 = vrcp.pop %v1598
  %v1600 = vmul.f32 %v1595, %v1599
  %v1601 = vlaneseq
  %v1602 = vshrl.u32 %v1601, 7
  %v1603 = vsub.s32 0, %v1602
  %v1604 = vrot.slane %v1521, %v1603
  %1606 = vbcast.lane.b32.xlu0 %v1604, 256
  %v1607 = vpop.permute.xlu0 %1606
  %s1609 = sor.u32 256, 8
  %1610 = vbcast.lane.b32.xlu0 %v1604, %s1609
  %v1611 = vpop.permute.xlu0 %1610
  %v1612 = vlaneseq
  %v1613 = vshrl.u32 %v1612, 7
  %v1614 = vsub.s32 1, %v1613
  %v1615 = vrot.slane %v1521, %v1614
  %1617 = vbcast.lane.b32.xlu0 %v1615, 256
  %v1618 = vpop.permute.xlu0 %1617
  %s1620 = sor.u32 256, 8
  %1621 = vbcast.lane.b32.xlu0 %v1615, %s1620
  %v1622 = vpop.permute.xlu0 %1621
  %vm1623 = vcmp.gt.f32.partialorder %v1607, 0.0
  %vm1624 = vcmp.gt.f32.partialorder %v1611, 0.0
  %vm1625 = vcmp.gt.f32.partialorder %v1618, 0.0
  %vm1626 = vcmp.gt.f32.partialorder %v1622, 0.0
  %v1627 = vsel %vm1623, 1, 0
  %v1628 = vsel %vm1624, 1, 0
  %v1629 = vsel %vm1625, 1, 0
  %v1630 = vsel %vm1626, 1, 0
  %vm1631 = vcmp.eq.s32.totalorder %v1627, 1
  %vm1632 = vcmp.eq.s32.totalorder %v1628, 1
  %vm1633 = vcmp.eq.s32.totalorder %v1629, 1
  %vm1634 = vcmp.eq.s32.totalorder %v1630, 1
  %v1635 = vsel %vm1631, %v1519, -1e+30
  %v1636 = vsel %vm1632, %v1520, -1e+30
  %v1637 = vsel %vm1633, %v1519, -1e+30
  %v1638 = vsel %vm1634, %v1520, -1e+30
  %v1639 = vmax.f32 %v1635, %v1636
  %v1640 = vrot.slane %v1639, 4
  %v1641 = vmax.f32 %v1639, %v1640
  %v1642 = vrot.slane %v1641, 2
  %v1643 = vmax.f32 %v1641, %v1642
  %v1644 = vrot.slane %v1643, 1
  %v1645 = vmax.f32 %v1643, %v1644
  %v1646 = vmax.f32 %v1637, %v1638
  %v1647 = vrot.slane %v1646, 4
  %v1648 = vmax.f32 %v1646, %v1647
  %v1649 = vrot.slane %v1648, 2
  %v1650 = vmax.f32 %v1648, %v1649
  %v1651 = vrot.slane %v1650, 1
  %v1652 = vmax.f32 %v1650, %v1651
  %vm1653 = vcmp.gt.f32.partialorder %v1524, 0.0
  %v1654 = vsel %vm1653, 1, 0
  %vm1655 = vcmp.eq.s32.totalorder %v1654, 1
  %v1658 = vsel %vm721, %v1652, %v1645
  %v1660 = vsel %vm1655, %v1658, 0.0
  %v1661 = vadd.f32 %v1193, %v1660
  %v1662 = vadd.f32 %v1194, %v1600
  %v1663 = vld [vmem:[%s14] sm:$0xff]
  %v1664 = vld [vmem:[%s14 + $0x8] sm:$0xff]
  %v1665 = vld [vmem:[%s14 + $0x10] sm:$0xff]
  %v1666 = vld [vmem:[%s14 + $0x18] sm:$0xff]
  %v1667 = vld [vmem:[%s14 + $0x20] sm:$0xff]
  %v1668 = vld [vmem:[%s14 + $0x28] sm:$0xff]
  %v1669 = vld [vmem:[%s14 + $0x30] sm:$0xff]
  %v1670 = vld [vmem:[%s14 + $0x38] sm:$0xff]
  %v1671 = vld [vmem:[%s14 + $0x40] sm:$0xff]
  %v1672 = vld [vmem:[%s14 + $0x48] sm:$0xff]
  %v1673 = vld [vmem:[%s14 + $0x50] sm:$0xff]
  %v1674 = vld [vmem:[%s14 + $0x58] sm:$0xff]
  %v1675 = vld [vmem:[%s14 + $0x60] sm:$0xff]
  %v1676 = vld [vmem:[%s14 + $0x68] sm:$0xff]
  %v1677 = vld [vmem:[%s14 + $0x70] sm:$0xff]
  %v1678 = vld [vmem:[%s14 + $0x78] sm:$0xff]
  %v1679 = vld [vmem:[%s14 + $0x80] sm:$0xff]
  %v1680 = vld [vmem:[%s14 + $0x88] sm:$0xff]
  %v1681 = vld [vmem:[%s14 + $0x90] sm:$0xff]
  %v1682 = vld [vmem:[%s14 + $0x98] sm:$0xff]
  %v1683 = vld [vmem:[%s14 + $0xa0] sm:$0xff]
  %v1684 = vld [vmem:[%s14 + $0xa8] sm:$0xff]
  %v1685 = vld [vmem:[%s14 + $0xb0] sm:$0xff]
  %v1686 = vld [vmem:[%s14 + $0xb8] sm:$0xff]
  %v1687 = vld [vmem:[%s14 + $0xc0] sm:$0xff]
  %v1688 = vld [vmem:[%s14 + $0xc8] sm:$0xff]
  %v1689 = vld [vmem:[%s14 + $0xd0] sm:$0xff]
  %v1690 = vld [vmem:[%s14 + $0xd8] sm:$0xff]
  %v1691 = vld [vmem:[%s14 + $0xe0] sm:$0xff]
  %v1692 = vld [vmem:[%s14 + $0xe8] sm:$0xff]
  %v1693 = vld [vmem:[%s14 + $0xf0] sm:$0xff]
  %v1694 = vld [vmem:[%s14 + $0xf8] sm:$0xff]
  %v1695 = vld [vmem:[%s15] sm:$0x1]
  %v1697 = vlaneseq
  %v1698 = vshrl.u32 %v1697, 7
  %v1699 = vsub.s32 0, %v1698
  %v1700 = vrot.slane %v1695, %v1699
  %1702 = vmatprep.subr.mxu0 0.0
  %1703 = vmatpush1.msra.mxu0 %v1663
  %1704 = vmatprep.subr.mxu0 0.0
  %1705 = vmatpush1.msra.mxu0 %v1664
  %1706 = vmatprep.subr.mxu0 0.0
  %1707 = vmatpush1.msra.mxu0 %v1665
  %1708 = vmatprep.subr.mxu0 0.0
  %1709 = vmatpush1.msra.mxu0 %v1666
  %1710 = vmatprep.subr.mxu0 0.0
  %1711 = vmatpush1.msra.mxu0 %v1667
  %1712 = vmatprep.subr.mxu0 0.0
  %1713 = vmatpush1.msra.mxu0 %v1668
  %1714 = vmatprep.subr.mxu0 0.0
  %1715 = vmatpush1.msra.mxu0 %v1669
  %1716 = vmatprep.subr.mxu0 0.0
  %1717 = vmatpush1.msra.mxu0 %v1670
  %1718 = vmatprep.subr.mxu0 0.0
  %1719 = vmatpush1.msra.mxu0 %v1671
  %1720 = vmatprep.subr.mxu0 0.0
  %1721 = vmatpush1.msra.mxu0 %v1672
  %1722 = vmatprep.subr.mxu0 0.0
  %1723 = vmatpush1.msra.mxu0 %v1673
  %1724 = vmatprep.subr.mxu0 0.0
  %1725 = vmatpush1.msra.mxu0 %v1674
  %1726 = vmatprep.subr.mxu0 0.0
  %1727 = vmatpush1.msra.mxu0 %v1675
  %1728 = vmatprep.subr.mxu0 0.0
  %1729 = vmatpush1.msra.mxu0 %v1676
  %1730 = vmatprep.subr.mxu0 0.0
  %1731 = vmatpush1.msra.mxu0 %v1677
  %1732 = vmatprep.subr.mxu0 0.0
  %1733 = vmatpush1.msra.mxu0 %v1678
  %1734 = vmatprep.subr.mxu0 0.0
  %1735 = vmatpush1.msra.mxu0 %v1679
  %1736 = vmatprep.subr.mxu0 0.0
  %1737 = vmatpush1.msra.mxu0 %v1680
  %1738 = vmatprep.subr.mxu0 0.0
  %1739 = vmatpush1.msra.mxu0 %v1681
  %1740 = vmatprep.subr.mxu0 0.0
  %1741 = vmatpush1.msra.mxu0 %v1682
  %1742 = vmatprep.subr.mxu0 0.0
  %1743 = vmatpush1.msra.mxu0 %v1683
  %1744 = vmatprep.subr.mxu0 0.0
  %1745 = vmatpush1.msra.mxu0 %v1684
  %1746 = vmatprep.subr.mxu0 0.0
  %1747 = vmatpush1.msra.mxu0 %v1685
  %1748 = vmatprep.subr.mxu0 0.0
  %1749 = vmatpush1.msra.mxu0 %v1686
  %1750 = vmatprep.subr.mxu0 0.0
  %1751 = vmatpush1.msra.mxu0 %v1687
  %1752 = vmatprep.subr.mxu0 0.0
  %1753 = vmatpush1.msra.mxu0 %v1688
  %1754 = vmatprep.subr.mxu0 0.0
  %1755 = vmatpush1.msra.mxu0 %v1689
  %1756 = vmatprep.subr.mxu0 0.0
  %1757 = vmatpush1.msra.mxu0 %v1690
  %1758 = vmatprep.subr.mxu0 0.0
  %1759 = vmatpush1.msra.mxu0 %v1691
  %1760 = vmatprep.subr.mxu0 0.0
  %1761 = vmatpush1.msra.mxu0 %v1692
  %1762 = vmatprep.subr.mxu0 0.0
  %1763 = vmatpush1.msra.mxu0 %v1693
  %1764 = vmatprep.subr.mxu0 0.0
  %1765 = vmatpush1.msra.mxu0 %v1694
  %1766 = vmatprep.mubr.f32.mxu0 %v1662
  %1767 = vmatmul.mubr.f32.gmra.mrb[0].mxu0 %v1661
  %v1768 = vpop.f32.mrb[0].mxu0
  %v1769 = vadd.f32 %v1700, %v1768
  %v1770 = vpop.f32.mrb[0].mxu0
  %1771 = vdwg.mxu0
  %v1772 = vmax.f32 %v1769, 0.0
  %v1773 = vld [vmem:[%s16] sm:$0xff]
  %v1774 = vld [vmem:[%s16 + $0x8] sm:$0xff]
  %v1775 = vld [vmem:[%s16 + $0x10] sm:$0xff]
  %v1776 = vld [vmem:[%s16 + $0x18] sm:$0xff]
  %v1777 = vld [vmem:[%s16 + $0x20] sm:$0xff]
  %v1778 = vld [vmem:[%s16 + $0x28] sm:$0xff]
  %v1779 = vld [vmem:[%s16 + $0x30] sm:$0xff]
  %v1780 = vld [vmem:[%s16 + $0x38] sm:$0xff]
  %v1781 = vld [vmem:[%s16 + $0x40] sm:$0xff]
  %v1782 = vld [vmem:[%s16 + $0x48] sm:$0xff]
  %v1783 = vld [vmem:[%s16 + $0x50] sm:$0xff]
  %v1784 = vld [vmem:[%s16 + $0x58] sm:$0xff]
  %v1785 = vld [vmem:[%s16 + $0x60] sm:$0xff]
  %v1786 = vld [vmem:[%s16 + $0x68] sm:$0xff]
  %v1787 = vld [vmem:[%s16 + $0x70] sm:$0xff]
  %v1788 = vld [vmem:[%s16 + $0x78] sm:$0xff]
  %v1789 = vld [vmem:[%s17] sm:$0x1]
  %v1791 = vlaneseq
  %v1792 = vshrl.u32 %v1791, 7
  %v1793 = vsub.s32 0, %v1792
  %v1794 = vrot.slane %v1789, %v1793
  %1796 = vmatprep.subr.mxu0 0.0
  %1797 = vmatpush1.msra.mxu0 %v1773
  %1798 = vmatprep.subr.mxu0 0.0
  %1799 = vmatpush1.msra.mxu0 %v1774
  %1800 = vmatprep.subr.mxu0 0.0
  %1801 = vmatpush1.msra.mxu0 %v1775
  %1802 = vmatprep.subr.mxu0 0.0
  %1803 = vmatpush1.msra.mxu0 %v1776
  %1804 = vmatprep.subr.mxu0 0.0
  %1805 = vmatpush1.msra.mxu0 %v1777
  %1806 = vmatprep.subr.mxu0 0.0
  %1807 = vmatpush1.msra.mxu0 %v1778
  %1808 = vmatprep.subr.mxu0 0.0
  %1809 = vmatpush1.msra.mxu0 %v1779
  %1810 = vmatprep.subr.mxu0 0.0
  %1811 = vmatpush1.msra.mxu0 %v1780
  %1812 = vmatprep.subr.mxu0 0.0
  %1813 = vmatpush1.msra.mxu0 %v1781
  %1814 = vmatprep.subr.mxu0 0.0
  %1815 = vmatpush1.msra.mxu0 %v1782
  %1816 = vmatprep.subr.mxu0 0.0
  %1817 = vmatpush1.msra.mxu0 %v1783
  %1818 = vmatprep.subr.mxu0 0.0
  %1819 = vmatpush1.msra.mxu0 %v1784
  %1820 = vmatprep.subr.mxu0 0.0
  %1821 = vmatpush1.msra.mxu0 %v1785
  %1822 = vmatprep.subr.mxu0 0.0
  %1823 = vmatpush1.msra.mxu0 %v1786
  %1824 = vmatprep.subr.mxu0 0.0
  %1825 = vmatpush1.msra.mxu0 %v1787
  %1826 = vmatprep.subr.mxu0 0.0
  %1827 = vmatpush1.msra.mxu0 %v1788
  %1828 = vmatprep.subr.mxu0 0.0
  %1829 = vmatpush1.msra.mxu0 0.0
  %1830 = vmatprep.subr.mxu0 0.0
  %1831 = vmatpush1.msra.mxu0 0.0
  %1832 = vmatprep.subr.mxu0 0.0
  %1833 = vmatpush1.msra.mxu0 0.0
  %1834 = vmatprep.subr.mxu0 0.0
  %1835 = vmatpush1.msra.mxu0 0.0
  %1836 = vmatprep.subr.mxu0 0.0
  %1837 = vmatpush1.msra.mxu0 0.0
  %1838 = vmatprep.subr.mxu0 0.0
  %1839 = vmatpush1.msra.mxu0 0.0
  %1840 = vmatprep.subr.mxu0 0.0
  %1841 = vmatpush1.msra.mxu0 0.0
  %1842 = vmatprep.subr.mxu0 0.0
  %1843 = vmatpush1.msra.mxu0 0.0
  %1844 = vmatprep.subr.mxu0 0.0
  %1845 = vmatpush1.msra.mxu0 0.0
  %1846 = vmatprep.subr.mxu0 0.0
  %1847 = vmatpush1.msra.mxu0 0.0
  %1848 = vmatprep.subr.mxu0 0.0
  %1849 = vmatpush1.msra.mxu0 0.0
  %1850 = vmatprep.subr.mxu0 0.0
  %1851 = vmatpush1.msra.mxu0 0.0
  %1852 = vmatprep.subr.mxu0 0.0
  %1853 = vmatpush1.msra.mxu0 0.0
  %1854 = vmatprep.subr.mxu0 0.0
  %1855 = vmatpush1.msra.mxu0 0.0
  %1856 = vmatprep.subr.mxu0 0.0
  %1857 = vmatpush1.msra.mxu0 0.0
  %1858 = vmatprep.subr.mxu0 0.0
  %1859 = vmatpush1.msra.mxu0 0.0
  %1860 = vmatprep.mubr.f32.mxu0 0.0
  %1861 = vmatmul.mubr.f32.gmra.mrb[0].mxu0 %v1772
  %v1862 = vpop.f32.mrb[0].mxu0
  %v1863 = vadd.f32 %v1794, %v1862
  %v1864 = vpop.f32.mrb[0].mxu0
  %1865 = vdwg.mxu0
  %v1866 = vmax.f32 %v1863, 0.0
  %v1867 = vld [vmem:[%s18] sm:$0xff]
  %v1868 = vld [vmem:[%s18 + $0x8] sm:$0xff]
  %v1869 = vld [vmem:[%s18 + $0x10] sm:$0xff]
  %v1870 = vld [vmem:[%s18 + $0x18] sm:$0xff]
  %v1871 = vld [vmem:[%s18 + $0x20] sm:$0xff]
  %v1872 = vld [vmem:[%s18 + $0x28] sm:$0xff]
  %v1873 = vld [vmem:[%s18 + $0x30] sm:$0xff]
  %v1874 = vld [vmem:[%s18 + $0x38] sm:$0xff]
  %v1875 = vld [vmem:[%s19] sm:$0x1]
  %v1877 = vlaneseq
  %v1878 = vshrl.u32 %v1877, 7
  %v1879 = vsub.s32 0, %v1878
  %v1880 = vrot.slane %v1875, %v1879
  %vm1882 = vcmask 523264
  %v1884 = vsel %vm1882, %v1866, 0
  %1886 = vmatprep.subr.mxu0 0.0
  %1887 = vmatpush1.msra.mxu0 %v1867
  %1888 = vmatprep.subr.mxu0 0.0
  %1889 = vmatpush1.msra.mxu0 %v1868
  %1890 = vmatprep.subr.mxu0 0.0
  %1891 = vmatpush1.msra.mxu0 %v1869
  %1892 = vmatprep.subr.mxu0 0.0
  %1893 = vmatpush1.msra.mxu0 %v1870
  %1894 = vmatprep.subr.mxu0 0.0
  %1895 = vmatpush1.msra.mxu0 %v1871
  %1896 = vmatprep.subr.mxu0 0.0
  %1897 = vmatpush1.msra.mxu0 %v1872
  %1898 = vmatprep.subr.mxu0 0.0
  %1899 = vmatpush1.msra.mxu0 %v1873
  %1900 = vmatprep.subr.mxu0 0.0
  %1901 = vmatpush1.msra.mxu0 %v1874
  %1902 = vmatprep.subr.mxu0 0.0
  %1903 = vmatpush1.msra.mxu0 0.0
  %1904 = vmatprep.subr.mxu0 0.0
  %1905 = vmatpush1.msra.mxu0 0.0
  %1906 = vmatprep.subr.mxu0 0.0
  %1907 = vmatpush1.msra.mxu0 0.0
  %1908 = vmatprep.subr.mxu0 0.0
  %1909 = vmatpush1.msra.mxu0 0.0
  %1910 = vmatprep.subr.mxu0 0.0
  %1911 = vmatpush1.msra.mxu0 0.0
  %1912 = vmatprep.subr.mxu0 0.0
  %1913 = vmatpush1.msra.mxu0 0.0
  %1914 = vmatprep.subr.mxu0 0.0
  %1915 = vmatpush1.msra.mxu0 0.0
  %1916 = vmatprep.subr.mxu0 0.0
  %1917 = vmatpush1.msra.mxu0 0.0
  %1918 = vmatprep.subr.mxu0 0.0
  %1919 = vmatpush1.msra.mxu0 0.0
  %1920 = vmatprep.subr.mxu0 0.0
  %1921 = vmatpush1.msra.mxu0 0.0
  %1922 = vmatprep.subr.mxu0 0.0
  %1923 = vmatpush1.msra.mxu0 0.0
  %1924 = vmatprep.subr.mxu0 0.0
  %1925 = vmatpush1.msra.mxu0 0.0
  %1926 = vmatprep.subr.mxu0 0.0
  %1927 = vmatpush1.msra.mxu0 0.0
  %1928 = vmatprep.subr.mxu0 0.0
  %1929 = vmatpush1.msra.mxu0 0.0
  %1930 = vmatprep.subr.mxu0 0.0
  %1931 = vmatpush1.msra.mxu0 0.0
  %1932 = vmatprep.subr.mxu0 0.0
  %1933 = vmatpush1.msra.mxu0 0.0
  %1934 = vmatprep.subr.mxu0 0.0
  %1935 = vmatpush1.msra.mxu0 0.0
  %1936 = vmatprep.subr.mxu0 0.0
  %1937 = vmatpush1.msra.mxu0 0.0
  %1938 = vmatprep.subr.mxu0 0.0
  %1939 = vmatpush1.msra.mxu0 0.0
  %1940 = vmatprep.subr.mxu0 0.0
  %1941 = vmatpush1.msra.mxu0 0.0
  %1942 = vmatprep.subr.mxu0 0.0
  %1943 = vmatpush1.msra.mxu0 0.0
  %1944 = vmatprep.subr.mxu0 0.0
  %1945 = vmatpush1.msra.mxu0 0.0
  %1946 = vmatprep.subr.mxu0 0.0
  %1947 = vmatpush1.msra.mxu0 0.0
  %1948 = vmatprep.subr.mxu0 0.0
  %1949 = vmatpush1.msra.mxu0 0.0
  %1950 = vmatprep.mubr.f32.mxu0 0.0
  %1951 = vmatmul.mubr.f32.gmra.mrb[0].mxu0 %v1884
  %v1952 = vpop.f32.mrb[0].mxu0
  %v1953 = vadd.f32 %v1880, %v1952
  %v1954 = vpop.f32.mrb[0].mxu0
  %1955 = vdwg.mxu0
  %v1956 = vxor.u32 %v1953, 2147483648
  %v1957 = vmul.f32 %v1956, 1.442695
  %v1958 = vpow.pop %v1957
  %v1959 = vadd.f32 %v1958, 1.0
  %v1960 = vrcp.pop %v1959
  %v1961 = vmul.f32 1.0, %v1960
  %1962 = vst [vmem:[%s20] sm:$0x3] %v1961
  // Predicated region
  $region82: #{net_forward.1} parent=0 // pred_check
    _
  $region83: #{net_forward.1} parent=0 // pred_check_branch
    %1964 = sbr.rel (0) target = $region85
  $region84: #{net_forward.1} parent=0 // pred_region
    _
  $region85: #{net_forward.1} parent=0 // pred_fallthru
    _
  // Predicated region
  $region86: #{net_forward.1} parent=0 // pred_check
    _
  $region87: #{net_forward.1} parent=0 // pred_check_branch
    %1966 = sbr.rel (0) target = $region89
  $region88: #{net_forward.1} parent=0 // pred_region
    _
  $region89: #{net_forward.1} parent=0 // pred_fallthru
    _

</llo_original>
